<compile_context>
chip_gen: v7x
topology: tpu7x:2x2x1
jax: 0.10.0
libtpu: 0.0.40
codegen_flags: <defaults>
</compile_context>

<pallas_src>
import math
import jax
import jax.numpy as jnp
from jax import lax
from jax.experimental import pallas as pl
from jax.experimental.pallas import tpu as pltpu

NUM_CLASSES = 10
C_PAD = 128  # lane-dense padded class dimension


def _round_up(x, m):
    return ((x + m - 1) // m) * m


def _linear_softmax_kernel(x_ref, w_ref, b_ref, o_ref):
    # MXU matmul, f32 accumulate. (TB, F) @ (F, C_PAD) -> (TB, C_PAD)
    logits = jnp.dot(x_ref[...], w_ref[...], preferred_element_type=jnp.float32)
    logits = logits + b_ref[...]  # bias broadcast over batch rows

    # Padded class lanes (>= NUM_CLASSES) must not contaminate the softmax:
    # set them to -inf so exp() -> 0 and they drop out of max/sum.
    lane = lax.broadcasted_iota(jnp.int32, logits.shape, dimension=1)
    logits = jnp.where(lane < NUM_CLASSES, logits, -jnp.inf)

    # Numerically-stable softmax along the class axis (== nn.Softmax(dim=-1)).
    m = jnp.max(logits, axis=-1, keepdims=True)
    e = jnp.exp(logits - m)
    denom = jnp.sum(e, axis=-1, keepdims=True)
    o_ref[...] = (e / denom).astype(o_ref.dtype)


def network_forward(x, w, b):
    """x: (B, F) f32, w: (F, 10) f32, b: (1, 10) f32  ->  (B, 10) f32."""
    B, F = x.shape
    Fw, C = w.shape
    assert F == Fw and C == NUM_CLASSES and b.shape == (1, C)

    # Batch tile: multiple of 8 (sublane), capped at 512 rows
    # ((512, 3072) f32 block = 6 MiB; x2 double-buffer fits v7x VMEM easily).
    TB = min(512, _round_up(B, 8))
    B_pad = _round_up(B, TB)
    num_tiles = B_pad // TB

    # Pad batch rows (zeros -> valid, discarded softmax rows) and class dim to
    # 128 lanes (zero weight/bias columns; kernel masks them to -inf).
    x_p = x if B_pad == B else jnp.pad(x, ((0, B_pad - B), (0, 0)))
    w_p = jnp.pad(w, ((0, 0), (0, C_PAD - C)))
    b_p = jnp.pad(b, ((0, 0), (0, C_PAD - C)))

    bytes_accessed = (
        x_p.size * 4 + w_p.size * 4 + b_p.size * 4 + B_pad * C_PAD * 4
    )
    out_padded = pl.pallas_call(
        _linear_softmax_kernel,
        out_shape=jax.ShapeDtypeStruct((B_pad, C_PAD), jnp.float32),
        grid_spec=pl.GridSpec(
            grid=(num_tiles,),
            in_specs=[
                pl.BlockSpec((TB, F), lambda i: (i, 0)),       # x: tiled batch
                pl.BlockSpec((F, C_PAD), lambda i: (0, 0)),    # w: VMEM-resident
                pl.BlockSpec((1, C_PAD), lambda i: (0, 0)),    # b: VMEM-resident
            ],
            out_specs=pl.BlockSpec((TB, C_PAD), lambda i: (i, 0)),
        ),
        compiler_params=pltpu.CompilerParams(
            dimension_semantics=("parallel",),  # batch tiles split across TCs
        ),
        cost_estimate=pl.CostEstimate(
            flops=2 * B_pad * F * C_PAD,
            transcendentals=B_pad * C_PAD,
            bytes_accessed=bytes_accessed,
        ),
    )(x_p, w_p, b_p)

    return out_padded[:B, :C]


def init_params(key, input_features=3 * 32 * 32, num_classes=NUM_CLASSES):
    """Deterministic init matching nn.Linear's default:
    U(-1/sqrt(fan_in), 1/sqrt(fan_in)) for both weight and bias."""
    kw, kb = jax.random.split(key)
    bound = 1.0 / math.sqrt(input_features)
    # Stored as (F, C) — transpose of PyTorch's (C, F) — so kernel does x @ W.
    w = jax.random.uniform(
        kw, (input_features, num_classes), jnp.float32, -bound, bound
    )
    b = jax.random.uniform(kb, (1, num_classes), jnp.float32, -bound, bound)
    return w, b


def reference_forward(x, w, b):
    logits = x @ w + b
    return jax.nn.softmax(logits, axis=-1)


if __name__ == "__main__":
    key = jax.random.PRNGKey(0)
    k_x, k_p = jax.random.split(key)

    batch = 8
    input_features = 3 * 32 * 32  # 3072, as the module's __init__ default

    # Synthetic CIFAR-like batch, already flattened as the module expects.
    x = jax.random.normal(k_x, (batch, input_features), jnp.float32)
    w, b = init_params(k_p, input_features=input_features, num_classes=10)

    out = network_forward(x, w, b)
    out = jax.block_until_ready(out)

    ref = reference_forward(x, w, b)
    assert out.shape == (batch, 10)
    assert jnp.allclose(out, ref, atol=1e-5, rtol=1e-5), "mismatch vs reference"
    assert jnp.allclose(jnp.sum(out, axis=-1), 1.0, atol=1e-5), "rows must sum to 1"

    print("KERNEL_OK")
</pallas_src>

<mosaic_0001>
module attributes {stable_mosaic.version = 11 : i64} {
  func.func @_linear_softmax_kernel(%arg0: i32, %arg1: memref<8x3072xf32, #tpu.memory_space<vmem>>, %arg2: memref<3072x128xf32, #tpu.memory_space<vmem>>, %arg3: memref<1x128xf32, #tpu.memory_space<vmem>>, %arg4: memref<8x128xf32, #tpu.memory_space<vmem>>) attributes {dimension_semantics = [#tpu.dimension_semantics<parallel>], iteration_bounds = array<i64: 1>, scalar_prefetch = 0 : i64, scratch_operands = 0 : i64, tpu.core_type = #tpu.core_type<tc>, window_params = [{transform_indices = @transform_0, window_bounds = array<i64: 8, 3072>}, {pipeline_mode = #tpu.pipeline_mode<synchronous>, transform_indices = @transform_1, window_bounds = array<i64: 3072, 128>}, {pipeline_mode = #tpu.pipeline_mode<synchronous>, transform_indices = @transform_2, window_bounds = array<i64: 1, 128>}, {transform_indices = @transform_3, window_bounds = array<i64: 8, 128>}]} {
    %c0 = arith.constant 0 : index
    %c0_0 = arith.constant 0 : index
    %0 = vector.load %arg1[%c0, %c0_0] : memref<8x3072xf32, #tpu.memory_space<vmem>>, vector<8x3072xf32>
    %c0_1 = arith.constant 0 : index
    %c0_2 = arith.constant 0 : index
    %1 = vector.load %arg2[%c0_1, %c0_2] : memref<3072x128xf32, #tpu.memory_space<vmem>>, vector<3072x128xf32>
    %cst = arith.constant dense<0.000000e+00> : vector<8x128xf32>
    %2 = tpu.matmul %0, %1, %cst {dimension_numbers = #tpu.dot_dimension_numbers<[1], [0], [0], [1], [0, 0, 1, 1], [], []>} : vector<8x3072xf32>, vector<3072x128xf32>, vector<8x128xf32> -> vector<8x128xf32>
    %c0_3 = arith.constant 0 : index
    %c0_4 = arith.constant 0 : index
    %3 = vector.load %arg3[%c0_3, %c0_4] : memref<1x128xf32, #tpu.memory_space<vmem>>, vector<1x128xf32>
    %4 = vector.broadcast %3 : vector<1x128xf32> to vector<8x128xf32>
    %5 = arith.addf %2, %4 : vector<8x128xf32>
    %6 = tpu.iota {dimensions = array<i32: 1>} : vector<8x128xi32>
    %c10_i32 = arith.constant 10 : i32
    %7 = vector.broadcast %c10_i32 : i32 to vector<8x128xi32>
    %8 = arith.cmpi slt, %6, %7 : vector<8x128xi32>
    %cst_5 = arith.constant 0xFF800000 : f32
    %9 = vector.broadcast %cst_5 : f32 to vector<8x128xf32>
    %10 = arith.select %8, %5, %9 : vector<8x128xi1>, vector<8x128xf32>
    %cst_6 = arith.constant dense<0xFF800000> : vector<8xf32>
    %11 = vector.multi_reduction <maximumf>, %10, %cst_6 [1] : vector<8x128xf32> to vector<8xf32>
    %12 = vector.shape_cast %11 : vector<8xf32> to vector<8x1xf32>
    %13 = vector.broadcast %12 : vector<8x1xf32> to vector<8x128xf32>
    %14 = arith.subf %10, %13 : vector<8x128xf32>
    %15 = math.exp %14 : vector<8x128xf32>
    %cst_7 = arith.constant dense<0.000000e+00> : vector<8xf32>
    %16 = vector.multi_reduction <add>, %15, %cst_7 [1] : vector<8x128xf32> to vector<8xf32>
    %17 = vector.shape_cast %16 : vector<8xf32> to vector<8x1xf32>
    %18 = vector.broadcast %17 : vector<8x1xf32> to vector<8x128xf32>
    %19 = arith.divf %15, %18 : vector<8x128xf32>
    %c0_8 = arith.constant 0 : index
    %c0_9 = arith.constant 0 : index
    %20 = vector.load %arg4[%c0_8, %c0_9] : memref<8x128xf32, #tpu.memory_space<vmem>>, vector<8x128xf32>
    tpu.vector_store %arg4[%c0_8, %c0_9], %19 {strides = array<i32>} : memref<8x128xf32, #tpu.memory_space<vmem>>, vector<8x128xf32>,
    return
  }
  func.func @transform_0(%arg0: i32) -> (i32, i32) {
    %c0_i32 = arith.constant 0 : i32
    %c0_i32_0 = arith.constant 0 : i32
    return %arg0, %c0_i32 : i32, i32
  }
  func.func @transform_1(%arg0: i32) -> (i32, i32) {
    %c0_i32 = arith.constant 0 : i32
    %c0_i32_0 = arith.constant 0 : i32
    %c0_i32_1 = arith.constant 0 : i32
    return %c0_i32, %c0_i32_0 : i32, i32
  }
  func.func @transform_2(%arg0: i32) -> (i32, i32) {
    %c0_i32 = arith.constant 0 : i32
    %c0_i32_0 = arith.constant 0 : i32
    %c0_i32_1 = arith.constant 0 : i32
    return %c0_i32, %c0_i32_0 : i32, i32
  }
  func.func @transform_3(%arg0: i32) -> (i32, i32) {
    %c0_i32 = arith.constant 0 : i32
    %c0_i32_0 = arith.constant 0 : i32
    return %arg0, %c0_i32 : i32, i32
  }
}

</mosaic_0001>

<llo_original>
// kernel: tpu_custom_call.1
$region0: #{tpu_custom_call.1}
  #allocation0 [shape = 'u32[]', space=smem, size = 0x4, offset = 0x4, fixed_abs, tag = 'smem constant byte address 0x4 - core index']
  #allocation1 [shape = 'u32[144,128]{1,0:T(1,128)}', space=vmem, size = 0x12000, scoped, tag = 'internal scratch']
  %s0 = inlined_call_operand.hbm [shape: f32[8,3072], index: 0, kind: input, shape index: {}]
  %s1 = inlined_call_operand.hbm [shape: f32[3072,128], index: 1, kind: input, shape index: {}]
  %s2 = inlined_call_operand.hbm [shape: f32[1,128], index: 2, kind: input, shape index: {}]
  %s3 = inlined_call_operand.hbm [shape: f32[8,128], index: 3, kind: output, shape index: {}]
  %s4 = sld [smem:[#allocation0]]
  $region34: #{tpu_custom_call.1} parent=0
    _
  %s6 = ssub.s32 1, %s4
  %s7 = scalar_select 0, %s6, %s4
  $region1: #{tpu_custom_call.1} parent=0
    #allocation2 [shape = 'u8[98304]{0}', space=vmem, size = 0x18000, scoped, tag = 'input window, operand 0, single buffered']
    #allocation3 [shape = 's32[1]{0}', space=sflag, size = 0x4, scoped, tag = 'scoped memory for tpu_custom_call.1']
    #allocation4 [shape = 's32[1]{0}', space=sflag, size = 0x4, scoped, tag = 'scoped memory for tpu_custom_call.1']
    #allocation5 [shape = 'u8[1572864]{0}', space=vmem, size = 0x180000, scoped, tag = 'input window, operand 1, single buffered']
    #allocation6 [shape = 's32[1]{0}', space=sflag, size = 0x4, scoped, tag = 'scoped memory for tpu_custom_call.1']
    #allocation7 [shape = 'u8[512]{0}', space=vmem, size = 0x400, scoped, tag = 'input window, operand 2, single buffered']
    #allocation8 [shape = 'u8[4096]{0}', space=vmem, size = 0x1000, scoped, tag = 'output window, operand 0, single buffered']
    %8 = vsyncpa [#allocation3], 0
    %9 = vsyncpa [#allocation6], 0
    %10 = vsyncpa [#allocation4], 0
    // Predicated region
    $region2: #{tpu_custom_call.1} parent=1 // pred_check
      _
    $region3: #{tpu_custom_call.1} parent=1 // pred_check_branch
      %12 = sbr.rel (0) target = $region5
    $region4: #{tpu_custom_call.1} parent=1 // pred_region
      %s14 = ssub.s32 3072, 3072
      %15 = vsyncadd [#allocation3], %s14
      %s17 = sshll.u32 [#allocation2], 4
      %s18 = int_to_ptr.vmem [resolvable:$true] %s17
      %20 = dma.hbm_to_vmem [thread:$0]  %s0, 3072, %s18, [#allocation3]
    $region5: #{tpu_custom_call.1} parent=1 // pred_fallthru
      _
    // Predicated region
    $region6: #{tpu_custom_call.1} parent=1 // pred_check
      _
    $region7: #{tpu_custom_call.1} parent=1 // pred_check_branch
      %22 = sbr.rel (0) target = $region9
    $region8: #{tpu_custom_call.1} parent=1 // pred_region
      %s24 = ssub.s32 49152, 49152
      %25 = vsyncadd [#allocation6], %s24
      %s26 = sshll.u32 [#allocation5], 4
      %s27 = int_to_ptr.vmem [resolvable:$true] %s26
      %32 = dma.hbm_to_vmem [thread:$0]  %s1, 49152, %s27, [#allocation6], 128, 128, 8
    $region9: #{tpu_custom_call.1} parent=1 // pred_fallthru
      _
    // Predicated region
    $region10: #{tpu_custom_call.1} parent=1 // pred_check
      _
    $region11: #{tpu_custom_call.1} parent=1 // pred_check_branch
      %34 = sbr.rel (0) target = $region13
    $region12: #{tpu_custom_call.1} parent=1 // pred_region
      %s36 = ssub.s32 16, 16
      %37 = vsyncadd [#allocation6], %s36
      %s39 = sshll.u32 [#allocation7], 4
      %s40 = int_to_ptr.vmem [resolvable:$true] %s39
      %42 = dma.hbm_to_vmem [thread:$0]  %s2, 16, %s40, [#allocation6]
    $region13: #{tpu_custom_call.1} parent=1 // pred_fallthru
      _
    // Predicated region
    $region14: #{tpu_custom_call.1} parent=1 // pred_check
      _
    $region15: #{tpu_custom_call.1} parent=1 // pred_check_branch
      %44 = sbr.rel (0) target = $region17
    $region16: #{tpu_custom_call.1} parent=1 // pred_region
      %45 = dma.done [#allocation3], 3072
    $region17: #{tpu_custom_call.1} parent=1 // pred_fallthru
      _
    // Predicated region
    $region18: #{tpu_custom_call.1} parent=1 // pred_check
      _
    $region19: #{tpu_custom_call.1} parent=1 // pred_check_branch
      %47 = sbr.rel (0) target = $region21
    $region20: #{tpu_custom_call.1} parent=1 // pred_region
      %48 = dma.done [#allocation6], 49152
    $region21: #{tpu_custom_call.1} parent=1 // pred_fallthru
      _
    // Predicated region
    $region22: #{tpu_custom_call.1} parent=1 // pred_check
      _
    $region23: #{tpu_custom_call.1} parent=1 // pred_check_branch
      %50 = sbr.rel (0) target = $region25
    $region24: #{tpu_custom_call.1} parent=1 // pred_region
      %51 = dma.done [#allocation6], 16
    $region25: #{tpu_custom_call.1} parent=1 // pred_fallthru
      _
    %v52 = vld [vmem:[#allocation2] sm:$0xff]
    %v53 = vld [vmem:[#allocation2 + $0x8] sm:$0xff]
    %v54 = vld [vmem:[#allocation2 + $0x10] sm:$0xff]
    %v55 = vld [vmem:[#allocation2 + $0x18] sm:$0xff]
    %v56 = vld [vmem:[#allocation2 + $0x20] sm:$0xff]
    %v57 = vld [vmem:[#allocation2 + $0x28] sm:$0xff]
    %v58 = vld [vmem:[#allocation2 + $0x30] sm:$0xff]
    %v59 = vld [vmem:[#allocation2 + $0x38] sm:$0xff]
    %v60 = vld [vmem:[#allocation2 + $0x40] sm:$0xff]
    %v61 = vld [vmem:[#allocation2 + $0x48] sm:$0xff]
    %v62 = vld [vmem:[#allocation2 + $0x50] sm:$0xff]
    %v63 = vld [vmem:[#allocation2 + $0x58] sm:$0xff]
    %v64 = vld [vmem:[#allocation2 + $0x60] sm:$0xff]
    %v65 = vld [vmem:[#allocation2 + $0x68] sm:$0xff]
    %v66 = vld [vmem:[#allocation2 + $0x70] sm:$0xff]
    %v67 = vld [vmem:[#allocation2 + $0x78] sm:$0xff]
    %v68 = vld [vmem:[#allocation2 + $0x80] sm:$0xff]
    %v69 = vld [vmem:[#allocation2 + $0x88] sm:$0xff]
    %v70 = vld [vmem:[#allocation2 + $0x90] sm:$0xff]
    %v71 = vld [vmem:[#allocation2 + $0x98] sm:$0xff]
    %v72 = vld [vmem:[#allocation2 + $0xa0] sm:$0xff]
    %v73 = vld [vmem:[#allocation2 + $0xa8] sm:$0xff]
    %v74 = vld [vmem:[#allocation2 + $0xb0] sm:$0xff]
    %v75 = vld [vmem:[#allocation2 + $0xb8] sm:$0xff]
    %v76 = vld [vmem:[#allocation5] sm:$0xff]
    %v77 = vld [vmem:[#allocation5 + $0x8] sm:$0xff]
    %v78 = vld [vmem:[#allocation5 + $0x10] sm:$0xff]
    %v79 = vld [vmem:[#allocation5 + $0x18] sm:$0xff]
    %v80 = vld [vmem:[#allocation5 + $0x20] sm:$0xff]
    %v81 = vld [vmem:[#allocation5 + $0x28] sm:$0xff]
    %v82 = vld [vmem:[#allocation5 + $0x30] sm:$0xff]
    %v83 = vld [vmem:[#allocation5 + $0x38] sm:$0xff]
    %v84 = vld [vmem:[#allocation5 + $0x40] sm:$0xff]
    %v85 = vld [vmem:[#allocation5 + $0x48] sm:$0xff]
    %v86 = vld [vmem:[#allocation5 + $0x50] sm:$0xff]
    %v87 = vld [vmem:[#allocation5 + $0x58] sm:$0xff]
    %v88 = vld [vmem:[#allocation5 + $0x60] sm:$0xff]
    %v89 = vld [vmem:[#allocation5 + $0x68] sm:$0xff]
    %v90 = vld [vmem:[#allocation5 + $0x70] sm:$0xff]
    %v91 = vld [vmem:[#allocation5 + $0x78] sm:$0xff]
    %v92 = vld [vmem:[#allocation5 + $0x80] sm:$0xff]
    %v93 = vld [vmem:[#allocation5 + $0x88] sm:$0xff]
    %v94 = vld [vmem:[#allocation5 + $0x90] sm:$0xff]
    %v95 = vld [vmem:[#allocation5 + $0x98] sm:$0xff]
    %v96 = vld [vmem:[#allocation5 + $0xa0] sm:$0xff]
    %v97 = vld [vmem:[#allocation5 + $0xa8] sm:$0xff]
    %v98 = vld [vmem:[#allocation5 + $0xb0] sm:$0xff]
    %v99 = vld [vmem:[#allocation5 + $0xb8] sm:$0xff]
    %v100 = vld [vmem:[#allocation5 + $0xc0] sm:$0xff]
    %v101 = vld [vmem:[#allocation5 + $0xc8] sm:$0xff]
    %v102 = vld [vmem:[#allocation5 + $0xd0] sm:$0xff]
    %v103 = vld [vmem:[#allocation5 + $0xd8] sm:$0xff]
    %v104 = vld [vmem:[#allocation5 + $0xe0] sm:$0xff]
    %v105 = vld [vmem:[#allocation5 + $0xe8] sm:$0xff]
    %v106 = vld [vmem:[#allocation5 + $0xf0] sm:$0xff]
    %v107 = vld [vmem:[#allocation5 + $0xf8] sm:$0xff]
    %v108 = vld [vmem:[#allocation5 + $0x100] sm:$0xff]
    %v109 = vld [vmem:[#allocation5 + $0x108] sm:$0xff]
    %v110 = vld [vmem:[#allocation5 + $0x110] sm:$0xff]
    %v111 = vld [vmem:[#allocation5 + $0x118] sm:$0xff]
    %v112 = vld [vmem:[#allocation5 + $0x120] sm:$0xff]
    %v113 = vld [vmem:[#allocation5 + $0x128] sm:$0xff]
    %v114 = vld [vmem:[#allocation5 + $0x130] sm:$0xff]
    %v115 = vld [vmem:[#allocation5 + $0x138] sm:$0xff]
    %v116 = vld [vmem:[#allocation5 + $0x140] sm:$0xff]
    %v117 = vld [vmem:[#allocation5 + $0x148] sm:$0xff]
    %v118 = vld [vmem:[#allocation5 + $0x150] sm:$0xff]
    %v119 = vld [vmem:[#allocation5 + $0x158] sm:$0xff]
    %v120 = vld [vmem:[#allocation5 + $0x160] sm:$0xff]
    %v121 = vld [vmem:[#allocation5 + $0x168] sm:$0xff]
    %v122 = vld [vmem:[#allocation5 + $0x170] sm:$0xff]
    %v123 = vld [vmem:[#allocation5 + $0x178] sm:$0xff]
    %v124 = vld [vmem:[#allocation5 + $0x180] sm:$0xff]
    %v125 = vld [vmem:[#allocation5 + $0x188] sm:$0xff]
    %v126 = vld [vmem:[#allocation5 + $0x190] sm:$0xff]
    %v127 = vld [vmem:[#allocation5 + $0x198] sm:$0xff]
    %v128 = vld [vmem:[#allocation5 + $0x1a0] sm:$0xff]
    %v129 = vld [vmem:[#allocation5 + $0x1a8] sm:$0xff]
    %v130 = vld [vmem:[#allocation5 + $0x1b0] sm:$0xff]
    %v131 = vld [vmem:[#allocation5 + $0x1b8] sm:$0xff]
    %v132 = vld [vmem:[#allocation5 + $0x1c0] sm:$0xff]
    %v133 = vld [vmem:[#allocation5 + $0x1c8] sm:$0xff]
    %v134 = vld [vmem:[#allocation5 + $0x1d0] sm:$0xff]
    %v135 = vld [vmem:[#allocation5 + $0x1d8] sm:$0xff]
    %v136 = vld [vmem:[#allocation5 + $0x1e0] sm:$0xff]
    %v137 = vld [vmem:[#allocation5 + $0x1e8] sm:$0xff]
    %v138 = vld [vmem:[#allocation5 + $0x1f0] sm:$0xff]
    %v139 = vld [vmem:[#allocation5 + $0x1f8] sm:$0xff]
    %v140 = vld [vmem:[#allocation5 + $0x200] sm:$0xff]
    %v141 = vld [vmem:[#allocation5 + $0x208] sm:$0xff]
    %v142 = vld [vmem:[#allocation5 + $0x210] sm:$0xff]
    %v143 = vld [vmem:[#allocation5 + $0x218] sm:$0xff]
    %v144 = vld [vmem:[#allocation5 + $0x220] sm:$0xff]
    %v145 = vld [vmem:[#allocation5 + $0x228] sm:$0xff]
    %v146 = vld [vmem:[#allocation5 + $0x230] sm:$0xff]
    %v147 = vld [vmem:[#allocation5 + $0x238] sm:$0xff]
    %v148 = vld [vmem:[#allocation5 + $0x240] sm:$0xff]
    %v149 = vld [vmem:[#allocation5 + $0x248] sm:$0xff]
    %v150 = vld [vmem:[#allocation5 + $0x250] sm:$0xff]
    %v151 = vld [vmem:[#allocation5 + $0x258] sm:$0xff]
    %v152 = vld [vmem:[#allocation5 + $0x260] sm:$0xff]
    %v153 = vld [vmem:[#allocation5 + $0x268] sm:$0xff]
    %v154 = vld [vmem:[#allocation5 + $0x270] sm:$0xff]
    %v155 = vld [vmem:[#allocation5 + $0x278] sm:$0xff]
    %v156 = vld [vmem:[#allocation5 + $0x280] sm:$0xff]
    %v157 = vld [vmem:[#allocation5 + $0x288] sm:$0xff]
    %v158 = vld [vmem:[#allocation5 + $0x290] sm:$0xff]
    %v159 = vld [vmem:[#allocation5 + $0x298] sm:$0xff]
    %v160 = vld [vmem:[#allocation5 + $0x2a0] sm:$0xff]
    %v161 = vld [vmem:[#allocation5 + $0x2a8] sm:$0xff]
    %v162 = vld [vmem:[#allocation5 + $0x2b0] sm:$0xff]
    %v163 = vld [vmem:[#allocation5 + $0x2b8] sm:$0xff]
    %v164 = vld [vmem:[#allocation5 + $0x2c0] sm:$0xff]
    %v165 = vld [vmem:[#allocation5 + $0x2c8] sm:$0xff]
    %v166 = vld [vmem:[#allocation5 + $0x2d0] sm:$0xff]
    %v167 = vld [vmem:[#allocation5 + $0x2d8] sm:$0xff]
    %v168 = vld [vmem:[#allocation5 + $0x2e0] sm:$0xff]
    %v169 = vld [vmem:[#allocation5 + $0x2e8] sm:$0xff]
    %v170 = vld [vmem:[#allocation5 + $0x2f0] sm:$0xff]
    %v171 = vld [vmem:[#allocation5 + $0x2f8] sm:$0xff]
    %v172 = vld [vmem:[#allocation5 + $0x300] sm:$0xff]
    %v173 = vld [vmem:[#allocation5 + $0x308] sm:$0xff]
    %v174 = vld [vmem:[#allocation5 + $0x310] sm:$0xff]
    %v175 = vld [vmem:[#allocation5 + $0x318] sm:$0xff]
    %v176 = vld [vmem:[#allocation5 + $0x320] sm:$0xff]
    %v177 = vld [vmem:[#allocation5 + $0x328] sm:$0xff]
    %v178 = vld [vmem:[#allocation5 + $0x330] sm:$0xff]
    %v179 = vld [vmem:[#allocation5 + $0x338] sm:$0xff]
    %v180 = vld [vmem:[#allocation5 + $0x340] sm:$0xff]
    %v181 = vld [vmem:[#allocation5 + $0x348] sm:$0xff]
    %v182 = vld [vmem:[#allocation5 + $0x350] sm:$0xff]
    %v183 = vld [vmem:[#allocation5 + $0x358] sm:$0xff]
    %v184 = vld [vmem:[#allocation5 + $0x360] sm:$0xff]
    %v185 = vld [vmem:[#allocation5 + $0x368] sm:$0xff]
    %v186 = vld [vmem:[#allocation5 + $0x370] sm:$0xff]
    %v187 = vld [vmem:[#allocation5 + $0x378] sm:$0xff]
    %v188 = vld [vmem:[#allocation5 + $0x380] sm:$0xff]
    %v189 = vld [vmem:[#allocation5 + $0x388] sm:$0xff]
    %v190 = vld [vmem:[#allocation5 + $0x390] sm:$0xff]
    %v191 = vld [vmem:[#allocation5 + $0x398] sm:$0xff]
    %v192 = vld [vmem:[#allocation5 + $0x3a0] sm:$0xff]
    %v193 = vld [vmem:[#allocation5 + $0x3a8] sm:$0xff]
    %v194 = vld [vmem:[#allocation5 + $0x3b0] sm:$0xff]
    %v195 = vld [vmem:[#allocation5 + $0x3b8] sm:$0xff]
    %v196 = vld [vmem:[#allocation5 + $0x3c0] sm:$0xff]
    %v197 = vld [vmem:[#allocation5 + $0x3c8] sm:$0xff]
    %v198 = vld [vmem:[#allocation5 + $0x3d0] sm:$0xff]
    %v199 = vld [vmem:[#allocation5 + $0x3d8] sm:$0xff]
    %v200 = vld [vmem:[#allocation5 + $0x3e0] sm:$0xff]
    %v201 = vld [vmem:[#allocation5 + $0x3e8] sm:$0xff]
    %v202 = vld [vmem:[#allocation5 + $0x3f0] sm:$0xff]
    %v203 = vld [vmem:[#allocation5 + $0x3f8] sm:$0xff]
    %v204 = vld [vmem:[#allocation5 + $0x400] sm:$0xff]
    %v205 = vld [vmem:[#allocation5 + $0x408] sm:$0xff]
    %v206 = vld [vmem:[#allocation5 + $0x410] sm:$0xff]
    %v207 = vld [vmem:[#allocation5 + $0x418] sm:$0xff]
    %v208 = vld [vmem:[#allocation5 + $0x420] sm:$0xff]
    %v209 = vld [vmem:[#allocation5 + $0x428] sm:$0xff]
    %v210 = vld [vmem:[#allocation5 + $0x430] sm:$0xff]
    %v211 = vld [vmem:[#allocation5 + $0x438] sm:$0xff]
    %v212 = vld [vmem:[#allocation5 + $0x440] sm:$0xff]
    %v213 = vld [vmem:[#allocation5 + $0x448] sm:$0xff]
    %v214 = vld [vmem:[#allocation5 + $0x450] sm:$0xff]
    %v215 = vld [vmem:[#allocation5 + $0x458] sm:$0xff]
    %v216 = vld [vmem:[#allocation5 + $0x460] sm:$0xff]
    %v217 = vld [vmem:[#allocation5 + $0x468] sm:$0xff]
    %v218 = vld [vmem:[#allocation5 + $0x470] sm:$0xff]
    %v219 = vld [vmem:[#allocation5 + $0x478] sm:$0xff]
    %v220 = vld [vmem:[#allocation5 + $0x480] sm:$0xff]
    %v221 = vld [vmem:[#allocation5 + $0x488] sm:$0xff]
    %v222 = vld [vmem:[#allocation5 + $0x490] sm:$0xff]
    %v223 = vld [vmem:[#allocation5 + $0x498] sm:$0xff]
    %v224 = vld [vmem:[#allocation5 + $0x4a0] sm:$0xff]
    %v225 = vld [vmem:[#allocation5 + $0x4a8] sm:$0xff]
    %v226 = vld [vmem:[#allocation5 + $0x4b0] sm:$0xff]
    %v227 = vld [vmem:[#allocation5 + $0x4b8] sm:$0xff]
    %v228 = vld [vmem:[#allocation5 + $0x4c0] sm:$0xff]
    %v229 = vld [vmem:[#allocation5 + $0x4c8] sm:$0xff]
    %v230 = vld [vmem:[#allocation5 + $0x4d0] sm:$0xff]
    %v231 = vld [vmem:[#allocation5 + $0x4d8] sm:$0xff]
    %v232 = vld [vmem:[#allocation5 + $0x4e0] sm:$0xff]
    %v233 = vld [vmem:[#allocation5 + $0x4e8] sm:$0xff]
    %v234 = vld [vmem:[#allocation5 + $0x4f0] sm:$0xff]
    %v235 = vld [vmem:[#allocation5 + $0x4f8] sm:$0xff]
    %v236 = vld [vmem:[#allocation5 + $0x500] sm:$0xff]
    %v237 = vld [vmem:[#allocation5 + $0x508] sm:$0xff]
    %v238 = vld [vmem:[#allocation5 + $0x510] sm:$0xff]
    %v239 = vld [vmem:[#allocation5 + $0x518] sm:$0xff]
    %v240 = vld [vmem:[#allocation5 + $0x520] sm:$0xff]
    %v241 = vld [vmem:[#allocation5 + $0x528] sm:$0xff]
    %v242 = vld [vmem:[#allocation5 + $0x530] sm:$0xff]
    %v243 = vld [vmem:[#allocation5 + $0x538] sm:$0xff]
    %v244 = vld [vmem:[#allocation5 + $0x540] sm:$0xff]
    %v245 = vld [vmem:[#allocation5 + $0x548] sm:$0xff]
    %v246 = vld [vmem:[#allocation5 + $0x550] sm:$0xff]
    %v247 = vld [vmem:[#allocation5 + $0x558] sm:$0xff]
    %v248 = vld [vmem:[#allocation5 + $0x560] sm:$0xff]
    %v249 = vld [vmem:[#allocation5 + $0x568] sm:$0xff]
    %v250 = vld [vmem:[#allocation5 + $0x570] sm:$0xff]
    %v251 = vld [vmem:[#allocation5 + $0x578] sm:$0xff]
    %v252 = vld [vmem:[#allocation5 + $0x580] sm:$0xff]
    %v253 = vld [vmem:[#allocation5 + $0x588] sm:$0xff]
    %v254 = vld [vmem:[#allocation5 + $0x590] sm:$0xff]
    %v255 = vld [vmem:[#allocation5 + $0x598] sm:$0xff]
    %v256 = vld [vmem:[#allocation5 + $0x5a0] sm:$0xff]
    %v257 = vld [vmem:[#allocation5 + $0x5a8] sm:$0xff]
    %v258 = vld [vmem:[#allocation5 + $0x5b0] sm:$0xff]
    %v259 = vld [vmem:[#allocation5 + $0x5b8] sm:$0xff]
    %v260 = vld [vmem:[#allocation5 + $0x5c0] sm:$0xff]
    %v261 = vld [vmem:[#allocation5 + $0x5c8] sm:$0xff]
    %v262 = vld [vmem:[#allocation5 + $0x5d0] sm:$0xff]
    %v263 = vld [vmem:[#allocation5 + $0x5d8] sm:$0xff]
    %v264 = vld [vmem:[#allocation5 + $0x5e0] sm:$0xff]
    %v265 = vld [vmem:[#allocation5 + $0x5e8] sm:$0xff]
    %v266 = vld [vmem:[#allocation5 + $0x5f0] sm:$0xff]
    %v267 = vld [vmem:[#allocation5 + $0x5f8] sm:$0xff]
    %v268 = vld [vmem:[#allocation5 + $0x600] sm:$0xff]
    %v269 = vld [vmem:[#allocation5 + $0x608] sm:$0xff]
    %v270 = vld [vmem:[#allocation5 + $0x610] sm:$0xff]
    %v271 = vld [vmem:[#allocation5 + $0x618] sm:$0xff]
    %v272 = vld [vmem:[#allocation5 + $0x620] sm:$0xff]
    %v273 = vld [vmem:[#allocation5 + $0x628] sm:$0xff]
    %v274 = vld [vmem:[#allocation5 + $0x630] sm:$0xff]
    %v275 = vld [vmem:[#allocation5 + $0x638] sm:$0xff]
    %v276 = vld [vmem:[#allocation5 + $0x640] sm:$0xff]
    %v277 = vld [vmem:[#allocation5 + $0x648] sm:$0xff]
    %v278 = vld [vmem:[#allocation5 + $0x650] sm:$0xff]
    %v279 = vld [vmem:[#allocation5 + $0x658] sm:$0xff]
    %v280 = vld [vmem:[#allocation5 + $0x660] sm:$0xff]
    %v281 = vld [vmem:[#allocation5 + $0x668] sm:$0xff]
    %v282 = vld [vmem:[#allocation5 + $0x670] sm:$0xff]
    %v283 = vld [vmem:[#allocation5 + $0x678] sm:$0xff]
    %v284 = vld [vmem:[#allocation5 + $0x680] sm:$0xff]
    %v285 = vld [vmem:[#allocation5 + $0x688] sm:$0xff]
    %v286 = vld [vmem:[#allocation5 + $0x690] sm:$0xff]
    %v287 = vld [vmem:[#allocation5 + $0x698] sm:$0xff]
    %v288 = vld [vmem:[#allocation5 + $0x6a0] sm:$0xff]
    %v289 = vld [vmem:[#allocation5 + $0x6a8] sm:$0xff]
    %v290 = vld [vmem:[#allocation5 + $0x6b0] sm:$0xff]
    %v291 = vld [vmem:[#allocation5 + $0x6b8] sm:$0xff]
    %v292 = vld [vmem:[#allocation5 + $0x6c0] sm:$0xff]
    %v293 = vld [vmem:[#allocation5 + $0x6c8] sm:$0xff]
    %v294 = vld [vmem:[#allocation5 + $0x6d0] sm:$0xff]
    %v295 = vld [vmem:[#allocation5 + $0x6d8] sm:$0xff]
    %v296 = vld [vmem:[#allocation5 + $0x6e0] sm:$0xff]
    %v297 = vld [vmem:[#allocation5 + $0x6e8] sm:$0xff]
    %v298 = vld [vmem:[#allocation5 + $0x6f0] sm:$0xff]
    %v299 = vld [vmem:[#allocation5 + $0x6f8] sm:$0xff]
    %v300 = vld [vmem:[#allocation5 + $0x700] sm:$0xff]
    %v301 = vld [vmem:[#allocation5 + $0x708] sm:$0xff]
    %v302 = vld [vmem:[#allocation5 + $0x710] sm:$0xff]
    %v303 = vld [vmem:[#allocation5 + $0x718] sm:$0xff]
    %v304 = vld [vmem:[#allocation5 + $0x720] sm:$0xff]
    %v305 = vld [vmem:[#allocation5 + $0x728] sm:$0xff]
    %v306 = vld [vmem:[#allocation5 + $0x730] sm:$0xff]
    %v307 = vld [vmem:[#allocation5 + $0x738] sm:$0xff]
    %v308 = vld [vmem:[#allocation5 + $0x740] sm:$0xff]
    %v309 = vld [vmem:[#allocation5 + $0x748] sm:$0xff]
    %v310 = vld [vmem:[#allocation5 + $0x750] sm:$0xff]
    %v311 = vld [vmem:[#allocation5 + $0x758] sm:$0xff]
    %v312 = vld [vmem:[#allocation5 + $0x760] sm:$0xff]
    %v313 = vld [vmem:[#allocation5 + $0x768] sm:$0xff]
    %v314 = vld [vmem:[#allocation5 + $0x770] sm:$0xff]
    %v315 = vld [vmem:[#allocation5 + $0x778] sm:$0xff]
    %v316 = vld [vmem:[#allocation5 + $0x780] sm:$0xff]
    %v317 = vld [vmem:[#allocation5 + $0x788] sm:$0xff]
    %v318 = vld [vmem:[#allocation5 + $0x790] sm:$0xff]
    %v319 = vld [vmem:[#allocation5 + $0x798] sm:$0xff]
    %v320 = vld [vmem:[#allocation5 + $0x7a0] sm:$0xff]
    %v321 = vld [vmem:[#allocation5 + $0x7a8] sm:$0xff]
    %v322 = vld [vmem:[#allocation5 + $0x7b0] sm:$0xff]
    %v323 = vld [vmem:[#allocation5 + $0x7b8] sm:$0xff]
    %v324 = vld [vmem:[#allocation5 + $0x7c0] sm:$0xff]
    %v325 = vld [vmem:[#allocation5 + $0x7c8] sm:$0xff]
    %v326 = vld [vmem:[#allocation5 + $0x7d0] sm:$0xff]
    %v327 = vld [vmem:[#allocation5 + $0x7d8] sm:$0xff]
    %v328 = vld [vmem:[#allocation5 + $0x7e0] sm:$0xff]
    %v329 = vld [vmem:[#allocation5 + $0x7e8] sm:$0xff]
    %v330 = vld [vmem:[#allocation5 + $0x7f0] sm:$0xff]
    %v331 = vld [vmem:[#allocation5 + $0x7f8] sm:$0xff]
    %v332 = vld [vmem:[#allocation5 + $0x800] sm:$0xff]
    %v333 = vld [vmem:[#allocation5 + $0x808] sm:$0xff]
    %v334 = vld [vmem:[#allocation5 + $0x810] sm:$0xff]
    %v335 = vld [vmem:[#allocation5 + $0x818] sm:$0xff]
    %v336 = vld [vmem:[#allocation5 + $0x820] sm:$0xff]
    %v337 = vld [vmem:[#allocation5 + $0x828] sm:$0xff]
    %v338 = vld [vmem:[#allocation5 + $0x830] sm:$0xff]
    %v339 = vld [vmem:[#allocation5 + $0x838] sm:$0xff]
    %v340 = vld [vmem:[#allocation5 + $0x840] sm:$0xff]
    %v341 = vld [vmem:[#allocation5 + $0x848] sm:$0xff]
    %v342 = vld [vmem:[#allocation5 + $0x850] sm:$0xff]
    %v343 = vld [vmem:[#allocation5 + $0x858] sm:$0xff]
    %v344 = vld [vmem:[#allocation5 + $0x860] sm:$0xff]
    %v345 = vld [vmem:[#allocation5 + $0x868] sm:$0xff]
    %v346 = vld [vmem:[#allocation5 + $0x870] sm:$0xff]
    %v347 = vld [vmem:[#allocation5 + $0x878] sm:$0xff]
    %v348 = vld [vmem:[#allocation5 + $0x880] sm:$0xff]
    %v349 = vld [vmem:[#allocation5 + $0x888] sm:$0xff]
    %v350 = vld [vmem:[#allocation5 + $0x890] sm:$0xff]
    %v351 = vld [vmem:[#allocation5 + $0x898] sm:$0xff]
    %v352 = vld [vmem:[#allocation5 + $0x8a0] sm:$0xff]
    %v353 = vld [vmem:[#allocation5 + $0x8a8] sm:$0xff]
    %v354 = vld [vmem:[#allocation5 + $0x8b0] sm:$0xff]
    %v355 = vld [vmem:[#allocation5 + $0x8b8] sm:$0xff]
    %v356 = vld [vmem:[#allocation5 + $0x8c0] sm:$0xff]
    %v357 = vld [vmem:[#allocation5 + $0x8c8] sm:$0xff]
    %v358 = vld [vmem:[#allocation5 + $0x8d0] sm:$0xff]
    %v359 = vld [vmem:[#allocation5 + $0x8d8] sm:$0xff]
    %v360 = vld [vmem:[#allocation5 + $0x8e0] sm:$0xff]
    %v361 = vld [vmem:[#allocation5 + $0x8e8] sm:$0xff]
    %v362 = vld [vmem:[#allocation5 + $0x8f0] sm:$0xff]
    %v363 = vld [vmem:[#allocation5 + $0x8f8] sm:$0xff]
    %v364 = vld [vmem:[#allocation5 + $0x900] sm:$0xff]
    %v365 = vld [vmem:[#allocation5 + $0x908] sm:$0xff]
    %v366 = vld [vmem:[#allocation5 + $0x910] sm:$0xff]
    %v367 = vld [vmem:[#allocation5 + $0x918] sm:$0xff]
    %v368 = vld [vmem:[#allocation5 + $0x920] sm:$0xff]
    %v369 = vld [vmem:[#allocation5 + $0x928] sm:$0xff]
    %v370 = vld [vmem:[#allocation5 + $0x930] sm:$0xff]
    %v371 = vld [vmem:[#allocation5 + $0x938] sm:$0xff]
    %v372 = vld [vmem:[#allocation5 + $0x940] sm:$0xff]
    %v373 = vld [vmem:[#allocation5 + $0x948] sm:$0xff]
    %v374 = vld [vmem:[#allocation5 + $0x950] sm:$0xff]
    %v375 = vld [vmem:[#allocation5 + $0x958] sm:$0xff]
    %v376 = vld [vmem:[#allocation5 + $0x960] sm:$0xff]
    %v377 = vld [vmem:[#allocation5 + $0x968] sm:$0xff]
    %v378 = vld [vmem:[#allocation5 + $0x970] sm:$0xff]
    %v379 = vld [vmem:[#allocation5 + $0x978] sm:$0xff]
    %v380 = vld [vmem:[#allocation5 + $0x980] sm:$0xff]
    %v381 = vld [vmem:[#allocation5 + $0x988] sm:$0xff]
    %v382 = vld [vmem:[#allocation5 + $0x990] sm:$0xff]
    %v383 = vld [vmem:[#allocation5 + $0x998] sm:$0xff]
    %v384 = vld [vmem:[#allocation5 + $0x9a0] sm:$0xff]
    %v385 = vld [vmem:[#allocation5 + $0x9a8] sm:$0xff]
    %v386 = vld [vmem:[#allocation5 + $0x9b0] sm:$0xff]
    %v387 = vld [vmem:[#allocation5 + $0x9b8] sm:$0xff]
    %v388 = vld [vmem:[#allocation5 + $0x9c0] sm:$0xff]
    %v389 = vld [vmem:[#allocation5 + $0x9c8] sm:$0xff]
    %v390 = vld [vmem:[#allocation5 + $0x9d0] sm:$0xff]
    %v391 = vld [vmem:[#allocation5 + $0x9d8] sm:$0xff]
    %v392 = vld [vmem:[#allocation5 + $0x9e0] sm:$0xff]
    %v393 = vld [vmem:[#allocation5 + $0x9e8] sm:$0xff]
    %v394 = vld [vmem:[#allocation5 + $0x9f0] sm:$0xff]
    %v395 = vld [vmem:[#allocation5 + $0x9f8] sm:$0xff]
    %v396 = vld [vmem:[#allocation5 + $0xa00] sm:$0xff]
    %v397 = vld [vmem:[#allocation5 + $0xa08] sm:$0xff]
    %v398 = vld [vmem:[#allocation5 + $0xa10] sm:$0xff]
    %v399 = vld [vmem:[#allocation5 + $0xa18] sm:$0xff]
    %v400 = vld [vmem:[#allocation5 + $0xa20] sm:$0xff]
    %v401 = vld [vmem:[#allocation5 + $0xa28] sm:$0xff]
    %v402 = vld [vmem:[#allocation5 + $0xa30] sm:$0xff]
    %v403 = vld [vmem:[#allocation5 + $0xa38] sm:$0xff]
    %v404 = vld [vmem:[#allocation5 + $0xa40] sm:$0xff]
    %v405 = vld [vmem:[#allocation5 + $0xa48] sm:$0xff]
    %v406 = vld [vmem:[#allocation5 + $0xa50] sm:$0xff]
    %v407 = vld [vmem:[#allocation5 + $0xa58] sm:$0xff]
    %v408 = vld [vmem:[#allocation5 + $0xa60] sm:$0xff]
    %v409 = vld [vmem:[#allocation5 + $0xa68] sm:$0xff]
    %v410 = vld [vmem:[#allocation5 + $0xa70] sm:$0xff]
    %v411 = vld [vmem:[#allocation5 + $0xa78] sm:$0xff]
    %v412 = vld [vmem:[#allocation5 + $0xa80] sm:$0xff]
    %v413 = vld [vmem:[#allocation5 + $0xa88] sm:$0xff]
    %v414 = vld [vmem:[#allocation5 + $0xa90] sm:$0xff]
    %v415 = vld [vmem:[#allocation5 + $0xa98] sm:$0xff]
    %v416 = vld [vmem:[#allocation5 + $0xaa0] sm:$0xff]
    %v417 = vld [vmem:[#allocation5 + $0xaa8] sm:$0xff]
    %v418 = vld [vmem:[#allocation5 + $0xab0] sm:$0xff]
    %v419 = vld [vmem:[#allocation5 + $0xab8] sm:$0xff]
    %v420 = vld [vmem:[#allocation5 + $0xac0] sm:$0xff]
    %v421 = vld [vmem:[#allocation5 + $0xac8] sm:$0xff]
    %v422 = vld [vmem:[#allocation5 + $0xad0] sm:$0xff]
    %v423 = vld [vmem:[#allocation5 + $0xad8] sm:$0xff]
    %v424 = vld [vmem:[#allocation5 + $0xae0] sm:$0xff]
    %v425 = vld [vmem:[#allocation5 + $0xae8] sm:$0xff]
    %v426 = vld [vmem:[#allocation5 + $0xaf0] sm:$0xff]
    %v427 = vld [vmem:[#allocation5 + $0xaf8] sm:$0xff]
    %v428 = vld [vmem:[#allocation5 + $0xb00] sm:$0xff]
    %v429 = vld [vmem:[#allocation5 + $0xb08] sm:$0xff]
    %v430 = vld [vmem:[#allocation5 + $0xb10] sm:$0xff]
    %v431 = vld [vmem:[#allocation5 + $0xb18] sm:$0xff]
    %v432 = vld [vmem:[#allocation5 + $0xb20] sm:$0xff]
    %v433 = vld [vmem:[#allocation5 + $0xb28] sm:$0xff]
    %v434 = vld [vmem:[#allocation5 + $0xb30] sm:$0xff]
    %v435 = vld [vmem:[#allocation5 + $0xb38] sm:$0xff]
    %v436 = vld [vmem:[#allocation5 + $0xb40] sm:$0xff]
    %v437 = vld [vmem:[#allocation5 + $0xb48] sm:$0xff]
    %v438 = vld [vmem:[#allocation5 + $0xb50] sm:$0xff]
    %v439 = vld [vmem:[#allocation5 + $0xb58] sm:$0xff]
    %v440 = vld [vmem:[#allocation5 + $0xb60] sm:$0xff]
    %v441 = vld [vmem:[#allocation5 + $0xb68] sm:$0xff]
    %v442 = vld [vmem:[#allocation5 + $0xb70] sm:$0xff]
    %v443 = vld [vmem:[#allocation5 + $0xb78] sm:$0xff]
    %v444 = vld [vmem:[#allocation5 + $0xb80] sm:$0xff]
    %v445 = vld [vmem:[#allocation5 + $0xb88] sm:$0xff]
    %v446 = vld [vmem:[#allocation5 + $0xb90] sm:$0xff]
    %v447 = vld [vmem:[#allocation5 + $0xb98] sm:$0xff]
    %v448 = vld [vmem:[#allocation5 + $0xba0] sm:$0xff]
    %v449 = vld [vmem:[#allocation5 + $0xba8] sm:$0xff]
    %v450 = vld [vmem:[#allocation5 + $0xbb0] sm:$0xff]
    %v451 = vld [vmem:[#allocation5 + $0xbb8] sm:$0xff]
    %v452 = vld [vmem:[#allocation5 + $0xbc0] sm:$0xff]
    %v453 = vld [vmem:[#allocation5 + $0xbc8] sm:$0xff]
    %v454 = vld [vmem:[#allocation5 + $0xbd0] sm:$0xff]
    %v455 = vld [vmem:[#allocation5 + $0xbd8] sm:$0xff]
    %v456 = vld [vmem:[#allocation5 + $0xbe0] sm:$0xff]
    %v457 = vld [vmem:[#allocation5 + $0xbe8] sm:$0xff]
    %v458 = vld [vmem:[#allocation5 + $0xbf0] sm:$0xff]
    %v459 = vld [vmem:[#allocation5 + $0xbf8] sm:$0xff]
    %v460 = vld [vmem:[#allocation7] sm:$0x1]
    %v462 = vlaneseq
    %v463 = vshrl.u32 %v462, 7
    %v464 = vsub.s32 0, %v463
    %v465 = vrot.slane %v460, %v464
    %467 = vmatprep.subr.mxu0 0.0
    %468 = vmatpush1.msra.mxu0 %v76
    %469 = vmatprep.subr.mxu0 0.0
    %470 = vmatpush1.msra.mxu0 %v77
    %471 = vmatprep.subr.mxu0 0.0
    %472 = vmatpush1.msra.mxu0 %v78
    %473 = vmatprep.subr.mxu0 0.0
    %474 = vmatpush1.msra.mxu0 %v79
    %475 = vmatprep.subr.mxu0 0.0
    %476 = vmatpush1.msra.mxu0 %v80
    %477 = vmatprep.subr.mxu0 0.0
    %478 = vmatpush1.msra.mxu0 %v81
    %479 = vmatprep.subr.mxu0 0.0
    %480 = vmatpush1.msra.mxu0 %v82
    %481 = vmatprep.subr.mxu0 0.0
    %482 = vmatpush1.msra.mxu0 %v83
    %483 = vmatprep.subr.mxu0 0.0
    %484 = vmatpush1.msra.mxu0 %v84
    %485 = vmatprep.subr.mxu0 0.0
    %486 = vmatpush1.msra.mxu0 %v85
    %487 = vmatprep.subr.mxu0 0.0
    %488 = vmatpush1.msra.mxu0 %v86
    %489 = vmatprep.subr.mxu0 0.0
    %490 = vmatpush1.msra.mxu0 %v87
    %491 = vmatprep.subr.mxu0 0.0
    %492 = vmatpush1.msra.mxu0 %v88
    %493 = vmatprep.subr.mxu0 0.0
    %494 = vmatpush1.msra.mxu0 %v89
    %495 = vmatprep.subr.mxu0 0.0
    %496 = vmatpush1.msra.mxu0 %v90
    %497 = vmatprep.subr.mxu0 0.0
    %498 = vmatpush1.msra.mxu0 %v91
    %499 = vmatprep.subr.mxu0 0.0
    %500 = vmatpush1.msra.mxu0 %v92
    %501 = vmatprep.subr.mxu0 0.0
    %502 = vmatpush1.msra.mxu0 %v93
    %503 = vmatprep.subr.mxu0 0.0
    %504 = vmatpush1.msra.mxu0 %v94
    %505 = vmatprep.subr.mxu0 0.0
    %506 = vmatpush1.msra.mxu0 %v95
    %507 = vmatprep.subr.mxu0 0.0
    %508 = vmatpush1.msra.mxu0 %v96
    %509 = vmatprep.subr.mxu0 0.0
    %510 = vmatpush1.msra.mxu0 %v97
    %511 = vmatprep.subr.mxu0 0.0
    %512 = vmatpush1.msra.mxu0 %v98
    %513 = vmatprep.subr.mxu0 0.0
    %514 = vmatpush1.msra.mxu0 %v99
    %515 = vmatprep.subr.mxu0 0.0
    %516 = vmatpush1.msra.mxu0 %v100
    %517 = vmatprep.subr.mxu0 0.0
    %518 = vmatpush1.msra.mxu0 %v101
    %519 = vmatprep.subr.mxu0 0.0
    %520 = vmatpush1.msra.mxu0 %v102
    %521 = vmatprep.subr.mxu0 0.0
    %522 = vmatpush1.msra.mxu0 %v103
    %523 = vmatprep.subr.mxu0 0.0
    %524 = vmatpush1.msra.mxu0 %v104
    %525 = vmatprep.subr.mxu0 0.0
    %526 = vmatpush1.msra.mxu0 %v105
    %527 = vmatprep.subr.mxu0 0.0
    %528 = vmatpush1.msra.mxu0 %v106
    %529 = vmatprep.subr.mxu0 0.0
    %530 = vmatpush1.msra.mxu0 %v107
    %531 = vmatprep.mubr.f32.mxu0 %v53
    %532 = vmatmul.mubr.f32.gmra.mrb[0].mxu0 %v52
    %v533 = vpop.f32.mrb[0].mxu0
    %v534 = vadd.f32 %v465, %v533
    %v535 = vpop.f32.mrb[0].mxu0
    %536 = vdwg.mxu0
    %537 = vmatprep.subr.mxu0 0.0
    %538 = vmatpush1.msra.mxu0 %v108
    %539 = vmatprep.subr.mxu0 0.0
    %540 = vmatpush1.msra.mxu0 %v109
    %541 = vmatprep.subr.mxu0 0.0
    %542 = vmatpush1.msra.mxu0 %v110
    %543 = vmatprep.subr.mxu0 0.0
    %544 = vmatpush1.msra.mxu0 %v111
    %545 = vmatprep.subr.mxu0 0.0
    %546 = vmatpush1.msra.mxu0 %v112
    %547 = vmatprep.subr.mxu0 0.0
    %548 = vmatpush1.msra.mxu0 %v113
    %549 = vmatprep.subr.mxu0 0.0
    %550 = vmatpush1.msra.mxu0 %v114
    %551 = vmatprep.subr.mxu0 0.0
    %552 = vmatpush1.msra.mxu0 %v115
    %553 = vmatprep.subr.mxu0 0.0
    %554 = vmatpush1.msra.mxu0 %v116
    %555 = vmatprep.subr.mxu0 0.0
    %556 = vmatpush1.msra.mxu0 %v117
    %557 = vmatprep.subr.mxu0 0.0
    %558 = vmatpush1.msra.mxu0 %v118
    %559 = vmatprep.subr.mxu0 0.0
    %560 = vmatpush1.msra.mxu0 %v119
    %561 = vmatprep.subr.mxu0 0.0
    %562 = vmatpush1.msra.mxu0 %v120
    %563 = vmatprep.subr.mxu0 0.0
    %564 = vmatpush1.msra.mxu0 %v121
    %565 = vmatprep.subr.mxu0 0.0
    %566 = vmatpush1.msra.mxu0 %v122
    %567 = vmatprep.subr.mxu0 0.0
    %568 = vmatpush1.msra.mxu0 %v123
    %569 = vmatprep.subr.mxu0 0.0
    %570 = vmatpush1.msra.mxu0 %v124
    %571 = vmatprep.subr.mxu0 0.0
    %572 = vmatpush1.msra.mxu0 %v125
    %573 = vmatprep.subr.mxu0 0.0
    %574 = vmatpush1.msra.mxu0 %v126
    %575 = vmatprep.subr.mxu0 0.0
    %576 = vmatpush1.msra.mxu0 %v127
    %577 = vmatprep.subr.mxu0 0.0
    %578 = vmatpush1.msra.mxu0 %v128
    %579 = vmatprep.subr.mxu0 0.0
    %580 = vmatpush1.msra.mxu0 %v129
    %581 = vmatprep.subr.mxu0 0.0
    %582 = vmatpush1.msra.mxu0 %v130
    %583 = vmatprep.subr.mxu0 0.0
    %584 = vmatpush1.msra.mxu0 %v131
    %585 = vmatprep.subr.mxu0 0.0
    %586 = vmatpush1.msra.mxu0 %v132
    %587 = vmatprep.subr.mxu0 0.0
    %588 = vmatpush1.msra.mxu0 %v133
    %589 = vmatprep.subr.mxu0 0.0
    %590 = vmatpush1.msra.mxu0 %v134
    %591 = vmatprep.subr.mxu0 0.0
    %592 = vmatpush1.msra.mxu0 %v135
    %593 = vmatprep.subr.mxu0 0.0
    %594 = vmatpush1.msra.mxu0 %v136
    %595 = vmatprep.subr.mxu0 0.0
    %596 = vmatpush1.msra.mxu0 %v137
    %597 = vmatprep.subr.mxu0 0.0
    %598 = vmatpush1.msra.mxu0 %v138
    %599 = vmatprep.subr.mxu0 0.0
    %600 = vmatpush1.msra.mxu0 %v139
    %601 = vmatprep.mubr.f32.mxu0 %v55
    %602 = vmatmul.mubr.f32.gmra.mrb[0].mxu0 %v54
    %v603 = vpop.f32.mrb[0].mxu0
    %v604 = vadd.f32 %v534, %v603
    %v605 = vpop.f32.mrb[0].mxu0
    %606 = vdwg.mxu0
    %607 = vmatprep.subr.mxu0 0.0
    %608 = vmatpush1.msra.mxu0 %v140
    %609 = vmatprep.subr.mxu0 0.0
    %610 = vmatpush1.msra.mxu0 %v141
    %611 = vmatprep.subr.mxu0 0.0
    %612 = vmatpush1.msra.mxu0 %v142
    %613 = vmatprep.subr.mxu0 0.0
    %614 = vmatpush1.msra.mxu0 %v143
    %615 = vmatprep.subr.mxu0 0.0
    %616 = vmatpush1.msra.mxu0 %v144
    %617 = vmatprep.subr.mxu0 0.0
    %618 = vmatpush1.msra.mxu0 %v145
    %619 = vmatprep.subr.mxu0 0.0
    %620 = vmatpush1.msra.mxu0 %v146
    %621 = vmatprep.subr.mxu0 0.0
    %622 = vmatpush1.msra.mxu0 %v147
    %623 = vmatprep.subr.mxu0 0.0
    %624 = vmatpush1.msra.mxu0 %v148
    %625 = vmatprep.subr.mxu0 0.0
    %626 = vmatpush1.msra.mxu0 %v149
    %627 = vmatprep.subr.mxu0 0.0
    %628 = vmatpush1.msra.mxu0 %v150
    %629 = vmatprep.subr.mxu0 0.0
    %630 = vmatpush1.msra.mxu0 %v151
    %631 = vmatprep.subr.mxu0 0.0
    %632 = vmatpush1.msra.mxu0 %v152
    %633 = vmatprep.subr.mxu0 0.0
    %634 = vmatpush1.msra.mxu0 %v153
    %635 = vmatprep.subr.mxu0 0.0
    %636 = vmatpush1.msra.mxu0 %v154
    %637 = vmatprep.subr.mxu0 0.0
    %638 = vmatpush1.msra.mxu0 %v155
    %639 = vmatprep.subr.mxu0 0.0
    %640 = vmatpush1.msra.mxu0 %v156
    %641 = vmatprep.subr.mxu0 0.0
    %642 = vmatpush1.msra.mxu0 %v157
    %643 = vmatprep.subr.mxu0 0.0
    %644 = vmatpush1.msra.mxu0 %v158
    %645 = vmatprep.subr.mxu0 0.0
    %646 = vmatpush1.msra.mxu0 %v159
    %647 = vmatprep.subr.mxu0 0.0
    %648 = vmatpush1.msra.mxu0 %v160
    %649 = vmatprep.subr.mxu0 0.0
    %650 = vmatpush1.msra.mxu0 %v161
    %651 = vmatprep.subr.mxu0 0.0
    %652 = vmatpush1.msra.mxu0 %v162
    %653 = vmatprep.subr.mxu0 0.0
    %654 = vmatpush1.msra.mxu0 %v163
    %655 = vmatprep.subr.mxu0 0.0
    %656 = vmatpush1.msra.mxu0 %v164
    %657 = vmatprep.subr.mxu0 0.0
    %658 = vmatpush1.msra.mxu0 %v165
    %659 = vmatprep.subr.mxu0 0.0
    %660 = vmatpush1.msra.mxu0 %v166
    %661 = vmatprep.subr.mxu0 0.0
    %662 = vmatpush1.msra.mxu0 %v167
    %663 = vmatprep.subr.mxu0 0.0
    %664 = vmatpush1.msra.mxu0 %v168
    %665 = vmatprep.subr.mxu0 0.0
    %666 = vmatpush1.msra.mxu0 %v169
    %667 = vmatprep.subr.mxu0 0.0
    %668 = vmatpush1.msra.mxu0 %v170
    %669 = vmatprep.subr.mxu0 0.0
    %670 = vmatpush1.msra.mxu0 %v171
    %671 = vmatprep.mubr.f32.mxu0 %v57
    %672 = vmatmul.mubr.f32.gmra.mrb[0].mxu0 %v56
    %v673 = vpop.f32.mrb[0].mxu0
    %v674 = vadd.f32 %v604, %v673
    %v675 = vpop.f32.mrb[0].mxu0
    %676 = vdwg.mxu0
    %677 = vmatprep.subr.mxu0 0.0
    %678 = vmatpush1.msra.mxu0 %v172
    %679 = vmatprep.subr.mxu0 0.0
    %680 = vmatpush1.msra.mxu0 %v173
    %681 = vmatprep.subr.mxu0 0.0
    %682 = vmatpush1.msra.mxu0 %v174
    %683 = vmatprep.subr.mxu0 0.0
    %684 = vmatpush1.msra.mxu0 %v175
    %685 = vmatprep.subr.mxu0 0.0
    %686 = vmatpush1.msra.mxu0 %v176
    %687 = vmatprep.subr.mxu0 0.0
    %688 = vmatpush1.msra.mxu0 %v177
    %689 = vmatprep.subr.mxu0 0.0
    %690 = vmatpush1.msra.mxu0 %v178
    %691 = vmatprep.subr.mxu0 0.0
    %692 = vmatpush1.msra.mxu0 %v179
    %693 = vmatprep.subr.mxu0 0.0
    %694 = vmatpush1.msra.mxu0 %v180
    %695 = vmatprep.subr.mxu0 0.0
    %696 = vmatpush1.msra.mxu0 %v181
    %697 = vmatprep.subr.mxu0 0.0
    %698 = vmatpush1.msra.mxu0 %v182
    %699 = vmatprep.subr.mxu0 0.0
    %700 = vmatpush1.msra.mxu0 %v183
    %701 = vmatprep.subr.mxu0 0.0
    %702 = vmatpush1.msra.mxu0 %v184
    %703 = vmatprep.subr.mxu0 0.0
    %704 = vmatpush1.msra.mxu0 %v185
    %705 = vmatprep.subr.mxu0 0.0
    %706 = vmatpush1.msra.mxu0 %v186
    %707 = vmatprep.subr.mxu0 0.0
    %708 = vmatpush1.msra.mxu0 %v187
    %709 = vmatprep.subr.mxu0 0.0
    %710 = vmatpush1.msra.mxu0 %v188
    %711 = vmatprep.subr.mxu0 0.0
    %712 = vmatpush1.msra.mxu0 %v189
    %713 = vmatprep.subr.mxu0 0.0
    %714 = vmatpush1.msra.mxu0 %v190
    %715 = vmatprep.subr.mxu0 0.0
    %716 = vmatpush1.msra.mxu0 %v191
    %717 = vmatprep.subr.mxu0 0.0
    %718 = vmatpush1.msra.mxu0 %v192
    %719 = vmatprep.subr.mxu0 0.0
    %720 = vmatpush1.msra.mxu0 %v193
    %721 = vmatprep.subr.mxu0 0.0
    %722 = vmatpush1.msra.mxu0 %v194
    %723 = vmatprep.subr.mxu0 0.0
    %724 = vmatpush1.msra.mxu0 %v195
    %725 = vmatprep.subr.mxu0 0.0
    %726 = vmatpush1.msra.mxu0 %v196
    %727 = vmatprep.subr.mxu0 0.0
    %728 = vmatpush1.msra.mxu0 %v197
    %729 = vmatprep.subr.mxu0 0.0
    %730 = vmatpush1.msra.mxu0 %v198
    %731 = vmatprep.subr.mxu0 0.0
    %732 = vmatpush1.msra.mxu0 %v199
    %733 = vmatprep.subr.mxu0 0.0
    %734 = vmatpush1.msra.mxu0 %v200
    %735 = vmatprep.subr.mxu0 0.0
    %736 = vmatpush1.msra.mxu0 %v201
    %737 = vmatprep.subr.mxu0 0.0
    %738 = vmatpush1.msra.mxu0 %v202
    %739 = vmatprep.subr.mxu0 0.0
    %740 = vmatpush1.msra.mxu0 %v203
    %741 = vmatprep.mubr.f32.mxu0 %v59
    %742 = vmatmul.mubr.f32.gmra.mrb[0].mxu0 %v58
    %v743 = vpop.f32.mrb[0].mxu0
    %v744 = vadd.f32 %v674, %v743
    %v745 = vpop.f32.mrb[0].mxu0
    %746 = vdwg.mxu0
    %747 = vmatprep.subr.mxu0 0.0
    %748 = vmatpush1.msra.mxu0 %v204
    %749 = vmatprep.subr.mxu0 0.0
    %750 = vmatpush1.msra.mxu0 %v205
    %751 = vmatprep.subr.mxu0 0.0
    %752 = vmatpush1.msra.mxu0 %v206
    %753 = vmatprep.subr.mxu0 0.0
    %754 = vmatpush1.msra.mxu0 %v207
    %755 = vmatprep.subr.mxu0 0.0
    %756 = vmatpush1.msra.mxu0 %v208
    %757 = vmatprep.subr.mxu0 0.0
    %758 = vmatpush1.msra.mxu0 %v209
    %759 = vmatprep.subr.mxu0 0.0
    %760 = vmatpush1.msra.mxu0 %v210
    %761 = vmatprep.subr.mxu0 0.0
    %762 = vmatpush1.msra.mxu0 %v211
    %763 = vmatprep.subr.mxu0 0.0
    %764 = vmatpush1.msra.mxu0 %v212
    %765 = vmatprep.subr.mxu0 0.0
    %766 = vmatpush1.msra.mxu0 %v213
    %767 = vmatprep.subr.mxu0 0.0
    %768 = vmatpush1.msra.mxu0 %v214
    %769 = vmatprep.subr.mxu0 0.0
    %770 = vmatpush1.msra.mxu0 %v215
    %771 = vmatprep.subr.mxu0 0.0
    %772 = vmatpush1.msra.mxu0 %v216
    %773 = vmatprep.subr.mxu0 0.0
    %774 = vmatpush1.msra.mxu0 %v217
    %775 = vmatprep.subr.mxu0 0.0
    %776 = vmatpush1.msra.mxu0 %v218
    %777 = vmatprep.subr.mxu0 0.0
    %778 = vmatpush1.msra.mxu0 %v219
    %779 = vmatprep.subr.mxu0 0.0
    %780 = vmatpush1.msra.mxu0 %v220
    %781 = vmatprep.subr.mxu0 0.0
    %782 = vmatpush1.msra.mxu0 %v221
    %783 = vmatprep.subr.mxu0 0.0
    %784 = vmatpush1.msra.mxu0 %v222
    %785 = vmatprep.subr.mxu0 0.0
    %786 = vmatpush1.msra.mxu0 %v223
    %787 = vmatprep.subr.mxu0 0.0
    %788 = vmatpush1.msra.mxu0 %v224
    %789 = vmatprep.subr.mxu0 0.0
    %790 = vmatpush1.msra.mxu0 %v225
    %791 = vmatprep.subr.mxu0 0.0
    %792 = vmatpush1.msra.mxu0 %v226
    %793 = vmatprep.subr.mxu0 0.0
    %794 = vmatpush1.msra.mxu0 %v227
    %795 = vmatprep.subr.mxu0 0.0
    %796 = vmatpush1.msra.mxu0 %v228
    %797 = vmatprep.subr.mxu0 0.0
    %798 = vmatpush1.msra.mxu0 %v229
    %799 = vmatprep.subr.mxu0 0.0
    %800 = vmatpush1.msra.mxu0 %v230
    %801 = vmatprep.subr.mxu0 0.0
    %802 = vmatpush1.msra.mxu0 %v231
    %803 = vmatprep.subr.mxu0 0.0
    %804 = vmatpush1.msra.mxu0 %v232
    %805 = vmatprep.subr.mxu0 0.0
    %806 = vmatpush1.msra.mxu0 %v233
    %807 = vmatprep.subr.mxu0 0.0
    %808 = vmatpush1.msra.mxu0 %v234
    %809 = vmatprep.subr.mxu0 0.0
    %810 = vmatpush1.msra.mxu0 %v235
    %811 = vmatprep.mubr.f32.mxu0 %v61
    %812 = vmatmul.mubr.f32.gmra.mrb[0].mxu0 %v60
    %v813 = vpop.f32.mrb[0].mxu0
    %v814 = vadd.f32 %v744, %v813
    %v815 = vpop.f32.mrb[0].mxu0
    %816 = vdwg.mxu0
    %817 = vmatprep.subr.mxu0 0.0
    %818 = vmatpush1.msra.mxu0 %v236
    %819 = vmatprep.subr.mxu0 0.0
    %820 = vmatpush1.msra.mxu0 %v237
    %821 = vmatprep.subr.mxu0 0.0
    %822 = vmatpush1.msra.mxu0 %v238
    %823 = vmatprep.subr.mxu0 0.0
    %824 = vmatpush1.msra.mxu0 %v239
    %825 = vmatprep.subr.mxu0 0.0
    %826 = vmatpush1.msra.mxu0 %v240
    %827 = vmatprep.subr.mxu0 0.0
    %828 = vmatpush1.msra.mxu0 %v241
    %829 = vmatprep.subr.mxu0 0.0
    %830 = vmatpush1.msra.mxu0 %v242
    %831 = vmatprep.subr.mxu0 0.0
    %832 = vmatpush1.msra.mxu0 %v243
    %833 = vmatprep.subr.mxu0 0.0
    %834 = vmatpush1.msra.mxu0 %v244
    %835 = vmatprep.subr.mxu0 0.0
    %836 = vmatpush1.msra.mxu0 %v245
    %837 = vmatprep.subr.mxu0 0.0
    %838 = vmatpush1.msra.mxu0 %v246
    %839 = vmatprep.subr.mxu0 0.0
    %840 = vmatpush1.msra.mxu0 %v247
    %841 = vmatprep.subr.mxu0 0.0
    %842 = vmatpush1.msra.mxu0 %v248
    %843 = vmatprep.subr.mxu0 0.0
    %844 = vmatpush1.msra.mxu0 %v249
    %845 = vmatprep.subr.mxu0 0.0
    %846 = vmatpush1.msra.mxu0 %v250
    %847 = vmatprep.subr.mxu0 0.0
    %848 = vmatpush1.msra.mxu0 %v251
    %849 = vmatprep.subr.mxu0 0.0
    %850 = vmatpush1.msra.mxu0 %v252
    %851 = vmatprep.subr.mxu0 0.0
    %852 = vmatpush1.msra.mxu0 %v253
    %853 = vmatprep.subr.mxu0 0.0
    %854 = vmatpush1.msra.mxu0 %v254
    %855 = vmatprep.subr.mxu0 0.0
    %856 = vmatpush1.msra.mxu0 %v255
    %857 = vmatprep.subr.mxu0 0.0
    %858 = vmatpush1.msra.mxu0 %v256
    %859 = vmatprep.subr.mxu0 0.0
    %860 = vmatpush1.msra.mxu0 %v257
    %861 = vmatprep.subr.mxu0 0.0
    %862 = vmatpush1.msra.mxu0 %v258
    %863 = vmatprep.subr.mxu0 0.0
    %864 = vmatpush1.msra.mxu0 %v259
    %865 = vmatprep.subr.mxu0 0.0
    %866 = vmatpush1.msra.mxu0 %v260
    %867 = vmatprep.subr.mxu0 0.0
    %868 = vmatpush1.msra.mxu0 %v261
    %869 = vmatprep.subr.mxu0 0.0
    %870 = vmatpush1.msra.mxu0 %v262
    %871 = vmatprep.subr.mxu0 0.0
    %872 = vmatpush1.msra.mxu0 %v263
    %873 = vmatprep.subr.mxu0 0.0
    %874 = vmatpush1.msra.mxu0 %v264
    %875 = vmatprep.subr.mxu0 0.0
    %876 = vmatpush1.msra.mxu0 %v265
    %877 = vmatprep.subr.mxu0 0.0
    %878 = vmatpush1.msra.mxu0 %v266
    %879 = vmatprep.subr.mxu0 0.0
    %880 = vmatpush1.msra.mxu0 %v267
    %881 = vmatprep.mubr.f32.mxu0 %v63
    %882 = vmatmul.mubr.f32.gmra.mrb[0].mxu0 %v62
    %v883 = vpop.f32.mrb[0].mxu0
    %v884 = vadd.f32 %v814, %v883
    %v885 = vpop.f32.mrb[0].mxu0
    %886 = vdwg.mxu0
    %887 = vmatprep.subr.mxu0 0.0
    %888 = vmatpush1.msra.mxu0 %v268
    %889 = vmatprep.subr.mxu0 0.0
    %890 = vmatpush1.msra.mxu0 %v269
    %891 = vmatprep.subr.mxu0 0.0
    %892 = vmatpush1.msra.mxu0 %v270
    %893 = vmatprep.subr.mxu0 0.0
    %894 = vmatpush1.msra.mxu0 %v271
    %895 = vmatprep.subr.mxu0 0.0
    %896 = vmatpush1.msra.mxu0 %v272
    %897 = vmatprep.subr.mxu0 0.0
    %898 = vmatpush1.msra.mxu0 %v273
    %899 = vmatprep.subr.mxu0 0.0
    %900 = vmatpush1.msra.mxu0 %v274
    %901 = vmatprep.subr.mxu0 0.0
    %902 = vmatpush1.msra.mxu0 %v275
    %903 = vmatprep.subr.mxu0 0.0
    %904 = vmatpush1.msra.mxu0 %v276
    %905 = vmatprep.subr.mxu0 0.0
    %906 = vmatpush1.msra.mxu0 %v277
    %907 = vmatprep.subr.mxu0 0.0
    %908 = vmatpush1.msra.mxu0 %v278
    %909 = vmatprep.subr.mxu0 0.0
    %910 = vmatpush1.msra.mxu0 %v279
    %911 = vmatprep.subr.mxu0 0.0
    %912 = vmatpush1.msra.mxu0 %v280
    %913 = vmatprep.subr.mxu0 0.0
    %914 = vmatpush1.msra.mxu0 %v281
    %915 = vmatprep.subr.mxu0 0.0
    %916 = vmatpush1.msra.mxu0 %v282
    %917 = vmatprep.subr.mxu0 0.0
    %918 = vmatpush1.msra.mxu0 %v283
    %919 = vmatprep.subr.mxu0 0.0
    %920 = vmatpush1.msra.mxu0 %v284
    %921 = vmatprep.subr.mxu0 0.0
    %922 = vmatpush1.msra.mxu0 %v285
    %923 = vmatprep.subr.mxu0 0.0
    %924 = vmatpush1.msra.mxu0 %v286
    %925 = vmatprep.subr.mxu0 0.0
    %926 = vmatpush1.msra.mxu0 %v287
    %927 = vmatprep.subr.mxu0 0.0
    %928 = vmatpush1.msra.mxu0 %v288
    %929 = vmatprep.subr.mxu0 0.0
    %930 = vmatpush1.msra.mxu0 %v289
    %931 = vmatprep.subr.mxu0 0.0
    %932 = vmatpush1.msra.mxu0 %v290
    %933 = vmatprep.subr.mxu0 0.0
    %934 = vmatpush1.msra.mxu0 %v291
    %935 = vmatprep.subr.mxu0 0.0
    %936 = vmatpush1.msra.mxu0 %v292
    %937 = vmatprep.subr.mxu0 0.0
    %938 = vmatpush1.msra.mxu0 %v293
    %939 = vmatprep.subr.mxu0 0.0
    %940 = vmatpush1.msra.mxu0 %v294
    %941 = vmatprep.subr.mxu0 0.0
    %942 = vmatpush1.msra.mxu0 %v295
    %943 = vmatprep.subr.mxu0 0.0
    %944 = vmatpush1.msra.mxu0 %v296
    %945 = vmatprep.subr.mxu0 0.0
    %946 = vmatpush1.msra.mxu0 %v297
    %947 = vmatprep.subr.mxu0 0.0
    %948 = vmatpush1.msra.mxu0 %v298
    %949 = vmatprep.subr.mxu0 0.0
    %950 = vmatpush1.msra.mxu0 %v299
    %951 = vmatprep.mubr.f32.mxu0 %v65
    %952 = vmatmul.mubr.f32.gmra.mrb[0].mxu0 %v64
    %v953 = vpop.f32.mrb[0].mxu0
    %v954 = vadd.f32 %v884, %v953
    %v955 = vpop.f32.mrb[0].mxu0
    %956 = vdwg.mxu0
    %957 = vmatprep.subr.mxu0 0.0
    %958 = vmatpush1.msra.mxu0 %v300
    %959 = vmatprep.subr.mxu0 0.0
    %960 = vmatpush1.msra.mxu0 %v301
    %961 = vmatprep.subr.mxu0 0.0
    %962 = vmatpush1.msra.mxu0 %v302
    %963 = vmatprep.subr.mxu0 0.0
    %964 = vmatpush1.msra.mxu0 %v303
    %965 = vmatprep.subr.mxu0 0.0
    %966 = vmatpush1.msra.mxu0 %v304
    %967 = vmatprep.subr.mxu0 0.0
    %968 = vmatpush1.msra.mxu0 %v305
    %969 = vmatprep.subr.mxu0 0.0
    %970 = vmatpush1.msra.mxu0 %v306
    %971 = vmatprep.subr.mxu0 0.0
    %972 = vmatpush1.msra.mxu0 %v307
    %973 = vmatprep.subr.mxu0 0.0
    %974 = vmatpush1.msra.mxu0 %v308
    %975 = vmatprep.subr.mxu0 0.0
    %976 = vmatpush1.msra.mxu0 %v309
    %977 = vmatprep.subr.mxu0 0.0
    %978 = vmatpush1.msra.mxu0 %v310
    %979 = vmatprep.subr.mxu0 0.0
    %980 = vmatpush1.msra.mxu0 %v311
    %981 = vmatprep.subr.mxu0 0.0
    %982 = vmatpush1.msra.mxu0 %v312
    %983 = vmatprep.subr.mxu0 0.0
    %984 = vmatpush1.msra.mxu0 %v313
    %985 = vmatprep.subr.mxu0 0.0
    %986 = vmatpush1.msra.mxu0 %v314
    %987 = vmatprep.subr.mxu0 0.0
    %988 = vmatpush1.msra.mxu0 %v315
    %989 = vmatprep.subr.mxu0 0.0
    %990 = vmatpush1.msra.mxu0 %v316
    %991 = vmatprep.subr.mxu0 0.0
    %992 = vmatpush1.msra.mxu0 %v317
    %993 = vmatprep.subr.mxu0 0.0
    %994 = vmatpush1.msra.mxu0 %v318
    %995 = vmatprep.subr.mxu0 0.0
    %996 = vmatpush1.msra.mxu0 %v319
    %997 = vmatprep.subr.mxu0 0.0
    %998 = vmatpush1.msra.mxu0 %v320
    %999 = vmatprep.subr.mxu0 0.0
    %1000 = vmatpush1.msra.mxu0 %v321
    %1001 = vmatprep.subr.mxu0 0.0
    %1002 = vmatpush1.msra.mxu0 %v322
    %1003 = vmatprep.subr.mxu0 0.0
    %1004 = vmatpush1.msra.mxu0 %v323
    %1005 = vmatprep.subr.mxu0 0.0
    %1006 = vmatpush1.msra.mxu0 %v324
    %1007 = vmatprep.subr.mxu0 0.0
    %1008 = vmatpush1.msra.mxu0 %v325
    %1009 = vmatprep.subr.mxu0 0.0
    %1010 = vmatpush1.msra.mxu0 %v326
    %1011 = vmatprep.subr.mxu0 0.0
    %1012 = vmatpush1.msra.mxu0 %v327
    %1013 = vmatprep.subr.mxu0 0.0
    %1014 = vmatpush1.msra.mxu0 %v328
    %1015 = vmatprep.subr.mxu0 0.0
    %1016 = vmatpush1.msra.mxu0 %v329
    %1017 = vmatprep.subr.mxu0 0.0
    %1018 = vmatpush1.msra.mxu0 %v330
    %1019 = vmatprep.subr.mxu0 0.0
    %1020 = vmatpush1.msra.mxu0 %v331
    %1021 = vmatprep.mubr.f32.mxu0 %v67
    %1022 = vmatmul.mubr.f32.gmra.mrb[0].mxu0 %v66
    %v1023 = vpop.f32.mrb[0].mxu0
    %v1024 = vadd.f32 %v954, %v1023
    %v1025 = vpop.f32.mrb[0].mxu0
    %1026 = vdwg.mxu0
    %1027 = vmatprep.subr.mxu0 0.0
    %1028 = vmatpush1.msra.mxu0 %v332
    %1029 = vmatprep.subr.mxu0 0.0
    %1030 = vmatpush1.msra.mxu0 %v333
    %1031 = vmatprep.subr.mxu0 0.0
    %1032 = vmatpush1.msra.mxu0 %v334
    %1033 = vmatprep.subr.mxu0 0.0
    %1034 = vmatpush1.msra.mxu0 %v335
    %1035 = vmatprep.subr.mxu0 0.0
    %1036 = vmatpush1.msra.mxu0 %v336
    %1037 = vmatprep.subr.mxu0 0.0
    %1038 = vmatpush1.msra.mxu0 %v337
    %1039 = vmatprep.subr.mxu0 0.0
    %1040 = vmatpush1.msra.mxu0 %v338
    %1041 = vmatprep.subr.mxu0 0.0
    %1042 = vmatpush1.msra.mxu0 %v339
    %1043 = vmatprep.subr.mxu0 0.0
    %1044 = vmatpush1.msra.mxu0 %v340
    %1045 = vmatprep.subr.mxu0 0.0
    %1046 = vmatpush1.msra.mxu0 %v341
    %1047 = vmatprep.subr.mxu0 0.0
    %1048 = vmatpush1.msra.mxu0 %v342
    %1049 = vmatprep.subr.mxu0 0.0
    %1050 = vmatpush1.msra.mxu0 %v343
    %1051 = vmatprep.subr.mxu0 0.0
    %1052 = vmatpush1.msra.mxu0 %v344
    %1053 = vmatprep.subr.mxu0 0.0
    %1054 = vmatpush1.msra.mxu0 %v345
    %1055 = vmatprep.subr.mxu0 0.0
    %1056 = vmatpush1.msra.mxu0 %v346
    %1057 = vmatprep.subr.mxu0 0.0
    %1058 = vmatpush1.msra.mxu0 %v347
    %1059 = vmatprep.subr.mxu0 0.0
    %1060 = vmatpush1.msra.mxu0 %v348
    %1061 = vmatprep.subr.mxu0 0.0
    %1062 = vmatpush1.msra.mxu0 %v349
    %1063 = vmatprep.subr.mxu0 0.0
    %1064 = vmatpush1.msra.mxu0 %v350
    %1065 = vmatprep.subr.mxu0 0.0
    %1066 = vmatpush1.msra.mxu0 %v351
    %1067 = vmatprep.subr.mxu0 0.0
    %1068 = vmatpush1.msra.mxu0 %v352
    %1069 = vmatprep.subr.mxu0 0.0
    %1070 = vmatpush1.msra.mxu0 %v353
    %1071 = vmatprep.subr.mxu0 0.0
    %1072 = vmatpush1.msra.mxu0 %v354
    %1073 = vmatprep.subr.mxu0 0.0
    %1074 = vmatpush1.msra.mxu0 %v355
    %1075 = vmatprep.subr.mxu0 0.0
    %1076 = vmatpush1.msra.mxu0 %v356
    %1077 = vmatprep.subr.mxu0 0.0
    %1078 = vmatpush1.msra.mxu0 %v357
    %1079 = vmatprep.subr.mxu0 0.0
    %1080 = vmatpush1.msra.mxu0 %v358
    %1081 = vmatprep.subr.mxu0 0.0
    %1082 = vmatpush1.msra.mxu0 %v359
    %1083 = vmatprep.subr.mxu0 0.0
    %1084 = vmatpush1.msra.mxu0 %v360
    %1085 = vmatprep.subr.mxu0 0.0
    %1086 = vmatpush1.msra.mxu0 %v361
    %1087 = vmatprep.subr.mxu0 0.0
    %1088 = vmatpush1.msra.mxu0 %v362
    %1089 = vmatprep.subr.mxu0 0.0
    %1090 = vmatpush1.msra.mxu0 %v363
    %1091 = vmatprep.mubr.f32.mxu0 %v69
    %1092 = vmatmul.mubr.f32.gmra.mrb[0].mxu0 %v68
    %v1093 = vpop.f32.mrb[0].mxu0
    %v1094 = vadd.f32 %v1024, %v1093
    %v1095 = vpop.f32.mrb[0].mxu0
    %1096 = vdwg.mxu0
    %1097 = vmatprep.subr.mxu0 0.0
    %1098 = vmatpush1.msra.mxu0 %v364
    %1099 = vmatprep.subr.mxu0 0.0
    %1100 = vmatpush1.msra.mxu0 %v365
    %1101 = vmatprep.subr.mxu0 0.0
    %1102 = vmatpush1.msra.mxu0 %v366
    %1103 = vmatprep.subr.mxu0 0.0
    %1104 = vmatpush1.msra.mxu0 %v367
    %1105 = vmatprep.subr.mxu0 0.0
    %1106 = vmatpush1.msra.mxu0 %v368
    %1107 = vmatprep.subr.mxu0 0.0
    %1108 = vmatpush1.msra.mxu0 %v369
    %1109 = vmatprep.subr.mxu0 0.0
    %1110 = vmatpush1.msra.mxu0 %v370
    %1111 = vmatprep.subr.mxu0 0.0
    %1112 = vmatpush1.msra.mxu0 %v371
    %1113 = vmatprep.subr.mxu0 0.0
    %1114 = vmatpush1.msra.mxu0 %v372
    %1115 = vmatprep.subr.mxu0 0.0
    %1116 = vmatpush1.msra.mxu0 %v373
    %1117 = vmatprep.subr.mxu0 0.0
    %1118 = vmatpush1.msra.mxu0 %v374
    %1119 = vmatprep.subr.mxu0 0.0
    %1120 = vmatpush1.msra.mxu0 %v375
    %1121 = vmatprep.subr.mxu0 0.0
    %1122 = vmatpush1.msra.mxu0 %v376
    %1123 = vmatprep.subr.mxu0 0.0
    %1124 = vmatpush1.msra.mxu0 %v377
    %1125 = vmatprep.subr.mxu0 0.0
    %1126 = vmatpush1.msra.mxu0 %v378
    %1127 = vmatprep.subr.mxu0 0.0
    %1128 = vmatpush1.msra.mxu0 %v379
    %1129 = vmatprep.subr.mxu0 0.0
    %1130 = vmatpush1.msra.mxu0 %v380
    %1131 = vmatprep.subr.mxu0 0.0
    %1132 = vmatpush1.msra.mxu0 %v381
    %1133 = vmatprep.subr.mxu0 0.0
    %1134 = vmatpush1.msra.mxu0 %v382
    %1135 = vmatprep.subr.mxu0 0.0
    %1136 = vmatpush1.msra.mxu0 %v383
    %1137 = vmatprep.subr.mxu0 0.0
    %1138 = vmatpush1.msra.mxu0 %v384
    %1139 = vmatprep.subr.mxu0 0.0
    %1140 = vmatpush1.msra.mxu0 %v385
    %1141 = vmatprep.subr.mxu0 0.0
    %1142 = vmatpush1.msra.mxu0 %v386
    %1143 = vmatprep.subr.mxu0 0.0
    %1144 = vmatpush1.msra.mxu0 %v387
    %1145 = vmatprep.subr.mxu0 0.0
    %1146 = vmatpush1.msra.mxu0 %v388
    %1147 = vmatprep.subr.mxu0 0.0
    %1148 = vmatpush1.msra.mxu0 %v389
    %1149 = vmatprep.subr.mxu0 0.0
    %1150 = vmatpush1.msra.mxu0 %v390
    %1151 = vmatprep.subr.mxu0 0.0
    %1152 = vmatpush1.msra.mxu0 %v391
    %1153 = vmatprep.subr.mxu0 0.0
    %1154 = vmatpush1.msra.mxu0 %v392
    %1155 = vmatprep.subr.mxu0 0.0
    %1156 = vmatpush1.msra.mxu0 %v393
    %1157 = vmatprep.subr.mxu0 0.0
    %1158 = vmatpush1.msra.mxu0 %v394
    %1159 = vmatprep.subr.mxu0 0.0
    %1160 = vmatpush1.msra.mxu0 %v395
    %1161 = vmatprep.mubr.f32.mxu0 %v71
    %1162 = vmatmul.mubr.f32.gmra.mrb[0].mxu0 %v70
    %v1163 = vpop.f32.mrb[0].mxu0
    %v1164 = vadd.f32 %v1094, %v1163
    %v1165 = vpop.f32.mrb[0].mxu0
    %1166 = vdwg.mxu0
    %1167 = vmatprep.subr.mxu0 0.0
    %1168 = vmatpush1.msra.mxu0 %v396
    %1169 = vmatprep.subr.mxu0 0.0
    %1170 = vmatpush1.msra.mxu0 %v397
    %1171 = vmatprep.subr.mxu0 0.0
    %1172 = vmatpush1.msra.mxu0 %v398
    %1173 = vmatprep.subr.mxu0 0.0
    %1174 = vmatpush1.msra.mxu0 %v399
    %1175 = vmatprep.subr.mxu0 0.0
    %1176 = vmatpush1.msra.mxu0 %v400
    %1177 = vmatprep.subr.mxu0 0.0
    %1178 = vmatpush1.msra.mxu0 %v401
    %1179 = vmatprep.subr.mxu0 0.0
    %1180 = vmatpush1.msra.mxu0 %v402
    %1181 = vmatprep.subr.mxu0 0.0
    %1182 = vmatpush1.msra.mxu0 %v403
    %1183 = vmatprep.subr.mxu0 0.0
    %1184 = vmatpush1.msra.mxu0 %v404
    %1185 = vmatprep.subr.mxu0 0.0
    %1186 = vmatpush1.msra.mxu0 %v405
    %1187 = vmatprep.subr.mxu0 0.0
    %1188 = vmatpush1.msra.mxu0 %v406
    %1189 = vmatprep.subr.mxu0 0.0
    %1190 = vmatpush1.msra.mxu0 %v407
    %1191 = vmatprep.subr.mxu0 0.0
    %1192 = vmatpush1.msra.mxu0 %v408
    %1193 = vmatprep.subr.mxu0 0.0
    %1194 = vmatpush1.msra.mxu0 %v409
    %1195 = vmatprep.subr.mxu0 0.0
    %1196 = vmatpush1.msra.mxu0 %v410
    %1197 = vmatprep.subr.mxu0 0.0
    %1198 = vmatpush1.msra.mxu0 %v411
    %1199 = vmatprep.subr.mxu0 0.0
    %1200 = vmatpush1.msra.mxu0 %v412
    %1201 = vmatprep.subr.mxu0 0.0
    %1202 = vmatpush1.msra.mxu0 %v413
    %1203 = vmatprep.subr.mxu0 0.0
    %1204 = vmatpush1.msra.mxu0 %v414
    %1205 = vmatprep.subr.mxu0 0.0
    %1206 = vmatpush1.msra.mxu0 %v415
    %1207 = vmatprep.subr.mxu0 0.0
    %1208 = vmatpush1.msra.mxu0 %v416
    %1209 = vmatprep.subr.mxu0 0.0
    %1210 = vmatpush1.msra.mxu0 %v417
    %1211 = vmatprep.subr.mxu0 0.0
    %1212 = vmatpush1.msra.mxu0 %v418
    %1213 = vmatprep.subr.mxu0 0.0
    %1214 = vmatpush1.msra.mxu0 %v419
    %1215 = vmatprep.subr.mxu0 0.0
    %1216 = vmatpush1.msra.mxu0 %v420
    %1217 = vmatprep.subr.mxu0 0.0
    %1218 = vmatpush1.msra.mxu0 %v421
    %1219 = vmatprep.subr.mxu0 0.0
    %1220 = vmatpush1.msra.mxu0 %v422
    %1221 = vmatprep.subr.mxu0 0.0
    %1222 = vmatpush1.msra.mxu0 %v423
    %1223 = vmatprep.subr.mxu0 0.0
    %1224 = vmatpush1.msra.mxu0 %v424
    %1225 = vmatprep.subr.mxu0 0.0
    %1226 = vmatpush1.msra.mxu0 %v425
    %1227 = vmatprep.subr.mxu0 0.0
    %1228 = vmatpush1.msra.mxu0 %v426
    %1229 = vmatprep.subr.mxu0 0.0
    %1230 = vmatpush1.msra.mxu0 %v427
    %1231 = vmatprep.mubr.f32.mxu0 %v73
    %1232 = vmatmul.mubr.f32.gmra.mrb[0].mxu0 %v72
    %v1233 = vpop.f32.mrb[0].mxu0
    %v1234 = vadd.f32 %v1164, %v1233
    %v1235 = vpop.f32.mrb[0].mxu0
    %1236 = vdwg.mxu0
    %1237 = vmatprep.subr.mxu0 0.0
    %1238 = vmatpush1.msra.mxu0 %v428
    %1239 = vmatprep.subr.mxu0 0.0
    %1240 = vmatpush1.msra.mxu0 %v429
    %1241 = vmatprep.subr.mxu0 0.0
    %1242 = vmatpush1.msra.mxu0 %v430
    %1243 = vmatprep.subr.mxu0 0.0
    %1244 = vmatpush1.msra.mxu0 %v431
    %1245 = vmatprep.subr.mxu0 0.0
    %1246 = vmatpush1.msra.mxu0 %v432
    %1247 = vmatprep.subr.mxu0 0.0
    %1248 = vmatpush1.msra.mxu0 %v433
    %1249 = vmatprep.subr.mxu0 0.0
    %1250 = vmatpush1.msra.mxu0 %v434
    %1251 = vmatprep.subr.mxu0 0.0
    %1252 = vmatpush1.msra.mxu0 %v435
    %1253 = vmatprep.subr.mxu0 0.0
    %1254 = vmatpush1.msra.mxu0 %v436
    %1255 = vmatprep.subr.mxu0 0.0
    %1256 = vmatpush1.msra.mxu0 %v437
    %1257 = vmatprep.subr.mxu0 0.0
    %1258 = vmatpush1.msra.mxu0 %v438
    %1259 = vmatprep.subr.mxu0 0.0
    %1260 = vmatpush1.msra.mxu0 %v439
    %1261 = vmatprep.subr.mxu0 0.0
    %1262 = vmatpush1.msra.mxu0 %v440
    %1263 = vmatprep.subr.mxu0 0.0
    %1264 = vmatpush1.msra.mxu0 %v441
    %1265 = vmatprep.subr.mxu0 0.0
    %1266 = vmatpush1.msra.mxu0 %v442
    %1267 = vmatprep.subr.mxu0 0.0
    %1268 = vmatpush1.msra.mxu0 %v443
    %1269 = vmatprep.subr.mxu0 0.0
    %1270 = vmatpush1.msra.mxu0 %v444
    %1271 = vmatprep.subr.mxu0 0.0
    %1272 = vmatpush1.msra.mxu0 %v445
    %1273 = vmatprep.subr.mxu0 0.0
    %1274 = vmatpush1.msra.mxu0 %v446
    %1275 = vmatprep.subr.mxu0 0.0
    %1276 = vmatpush1.msra.mxu0 %v447
    %1277 = vmatprep.subr.mxu0 0.0
    %1278 = vmatpush1.msra.mxu0 %v448
    %1279 = vmatprep.subr.mxu0 0.0
    %1280 = vmatpush1.msra.mxu0 %v449
    %1281 = vmatprep.subr.mxu0 0.0
    %1282 = vmatpush1.msra.mxu0 %v450
    %1283 = vmatprep.subr.mxu0 0.0
    %1284 = vmatpush1.msra.mxu0 %v451
    %1285 = vmatprep.subr.mxu0 0.0
    %1286 = vmatpush1.msra.mxu0 %v452
    %1287 = vmatprep.subr.mxu0 0.0
    %1288 = vmatpush1.msra.mxu0 %v453
    %1289 = vmatprep.subr.mxu0 0.0
    %1290 = vmatpush1.msra.mxu0 %v454
    %1291 = vmatprep.subr.mxu0 0.0
    %1292 = vmatpush1.msra.mxu0 %v455
    %1293 = vmatprep.subr.mxu0 0.0
    %1294 = vmatpush1.msra.mxu0 %v456
    %1295 = vmatprep.subr.mxu0 0.0
    %1296 = vmatpush1.msra.mxu0 %v457
    %1297 = vmatprep.subr.mxu0 0.0
    %1298 = vmatpush1.msra.mxu0 %v458
    %1299 = vmatprep.subr.mxu0 0.0
    %1300 = vmatpush1.msra.mxu0 %v459
    %1301 = vmatprep.mubr.f32.mxu0 %v75
    %1302 = vmatmul.mubr.f32.gmra.mrb[0].mxu0 %v74
    %v1303 = vpop.f32.mrb[0].mxu0
    %v1304 = vadd.f32 %v1234, %v1303
    %v1305 = vpop.f32.mrb[0].mxu0
    %1306 = vdwg.mxu0
    %v1307 = vlaneseq
    %v1308 = vand.u32 %v1307, 127
    %vm1309 = vcmp.lt.s32.totalorder %v1308, 10
    %v1310 = vsel %vm1309, %v1304, -inf
    %1311 = vmax.xlane.f32.xlu0 %v1310
    %v1312 = vpop.xlane.xlu0 %1311
    %v1313 = vsub.f32 %v1310, %v1312
    %v1314 = vmul.f32 %v1313, 1.442695
    %v1315 = vpow.pop %v1314
    %1316 = vadd.xlane.f32.xlu0 %v1315
    %v1317 = vpop.xlane.xlu0 %1316
    %v1318 = vrcp.pop %v1317
    %v1319 = vmul.f32 %v1315, %v1318
    %1320 = vst [vmem:[#allocation8] sm:$0xff] %v1319
    // Predicated region
    $region26: #{tpu_custom_call.1} parent=1 // pred_check
      _
    $region27: #{tpu_custom_call.1} parent=1 // pred_check_branch
      %1322 = sbr.rel (0) target = $region29
    $region28: #{tpu_custom_call.1} parent=1 // pred_region
      %s1324 = ssub.s32 128, 128
      %1325 = vsyncadd [#allocation4], %s1324
      %s1327 = sshll.u32 [#allocation8], 4
      %s1328 = int_to_ptr.vmem [resolvable:$true] %s1327
      %1330 = dma.vmem_to_hbm [thread:$0]  %s1328, 128, %s3, [#allocation4]
    $region29: #{tpu_custom_call.1} parent=1 // pred_fallthru
      _
    // Predicated region
    $region30: #{tpu_custom_call.1} parent=1 // pred_check
      _
    $region31: #{tpu_custom_call.1} parent=1 // pred_check_branch
      %1332 = sbr.rel (0) target = $region33
    $region32: #{tpu_custom_call.1} parent=1 // pred_region
      %1333 = dma.done [#allocation4], 128
    $region33: #{tpu_custom_call.1} parent=1 // pred_fallthru
      _
    %1334 = vsyncpa [#allocation3], 1
    %1335 = vsyncpa [#allocation6], 1
    %1336 = vsyncpa [#allocation4], 1

</llo_original>
